<compile_context>
chip_gen: v5e
topology: v5e:2x2
jax: 0.10.0
libtpu: 0.0.40
codegen_flags: <defaults>
</compile_context>

<pallas_src>
import functools

import jax
import jax.numpy as jnp
import numpy as np
from jax import lax
from jax.experimental import pallas as pl
from jax.experimental.pallas import tpu as pltpu


# ----------------------------- Pallas kernel ------------------------------

def _coattention_kernel(pose_ref, pc_ref,            # flattened activations
                        wt_ref, wv_ref, wc_ref,      # pre-transposed weights
                        fcw12_ref, bias12_ref,       # packed fc1/fc2 weights & biases
                        fc3bd_ref, fc3b_ref,         # block-diag fc3^T, lane-tiled bias
                        out_ref,
                        *, bt, s_p, s_c):
    f32 = jnp.float32
    pose = pose_ref[...]                         # (bt*s_p, D_p)
    pc = pc_ref[...]                             # (bt*s_c, D_c)
    w_c = wc_ref[...]                            # (NV, D_p + D_c)
    fc1w_t = fcw12_ref[0]                        # (H, H) == fc1_w.T
    fc2w_t = fcw12_ref[1]                        # (H, H) == fc2_w.T
    b1 = bias12_ref[0:1, :]                      # (1, H)
    b2 = bias12_ref[1:2, :]                      # (1, H)
    h = fc1w_t.shape[1]

    # ---- batch-wide head: projection -> tanh -> fc1/fc2, flattened over bt*S ----
    # tanh(W_t @ pose^T)^T == tanh(pose @ W_t^T); weights already transposed.
    t_p = jnp.tanh(jnp.dot(pose, wt_ref[...], preferred_element_type=f32))   # (bt*s_p, H)
    t_c = jnp.tanh(jnp.dot(pc, wv_ref[...], preferred_element_type=f32))     # (bt*s_c, H)
    sc_p = jnp.dot(t_p, fc1w_t, preferred_element_type=f32) + b1             # (bt*s_p, H)
    sc_c = jnp.dot(t_c, fc2w_t, preferred_element_type=f32) + b2             # (bt*s_c, H)

    # ---- softmax over the sequence axis, batched over all bt groups at once ----
    def batched_softmax(scores, seq):
        x = scores.reshape(bt, seq, h)                       # 8-aligned sublane split
        m = jnp.max(x, axis=1, keepdims=True)
        e = jnp.exp(x - m)
        inv = pl.reciprocal(jnp.sum(e, axis=1, keepdims=True), approx=False)
        return (e * inv).reshape(bt * seq, h)

    a_p = batched_softmax(sc_p, s_p)                          # (bt*s_p, H)
    a_c = batched_softmax(sc_c, s_c)                          # (bt*s_c, H)

    # ---- attention-apply per batch, lane-concatenated into one wide slab ----
    # contract axis 0 of both operands: (S, D) x (S, H) -> (D, H); no explicit
    # transpose of the activations is materialized.
    contract0 = (((0,), (0,)), ((), ()))
    parts = []
    for b in range(bt):
        pose_b = pose[b * s_p:(b + 1) * s_p, :]               # (s_p, D_p)
        pc_b = pc[b * s_c:(b + 1) * s_c, :]                   # (s_c, D_c)
        att_p = lax.dot_general(pose_b, a_p[b * s_p:(b + 1) * s_p, :],
                                contract0, preferred_element_type=f32)   # (D_p, H)
        att_c = lax.dot_general(pc_b, a_c[b * s_c:(b + 1) * s_c, :],
                                contract0, preferred_element_type=f32)   # (D_c, H)
        parts.append(jnp.concatenate([att_p, att_c], axis=0))            # (D, H)
    comb_all = parts[0] if bt == 1 else jnp.concatenate(parts, axis=1)   # (D, bt*H)

    # One wide W_c matmul, one wide block-diagonal fc3 matmul, one swish,
    # one lane-dense store of the whole (NV, bt*H) slab.
    m_all = jnp.dot(w_c, comb_all, preferred_element_type=f32)           # (NV, bt*H)
    z = jnp.dot(m_all, fc3bd_ref[...], preferred_element_type=f32) + fc3b_ref[...]
    out_ref[...] = z * jax.nn.sigmoid(z)                                  # swish


# ------------------------------ host wrapper ------------------------------

def _num_tensorcores():
    """2 TensorCores per chip on v7x, 1 on v5e/v6e (best-effort detection)."""
    try:
        kind = jax.devices()[0].device_kind.lower()
    except Exception:
        return 1
    return 2 if "v7" in kind else 1


def coattention_pallas(pose_embeds, pc_embeds, params, *, batch_tile=None):
    f32 = jnp.float32
    B, S_p, D_p = pose_embeds.shape
    B2, S_c, D_c = pc_embeds.shape
    assert B == B2
    H = params["W_t"].shape[0]
    NV = params["W_c"].shape[0]
    # The PyTorch .squeeze(2) calls are no-ops only when hidden_size > 1.
    assert H > 1

    # Grid-step count driven by core count, never by memory (KiB-scale footprint):
    #   v5e/v6e: 1 step (grid is a serial loop on a single TC),
    #   v7x:     2 "parallel" steps (one per TensorCore).
    if batch_tile is None:
        steps = 2 if (_num_tensorcores() >= 2 and B >= 2 and B % 2 == 0) else 1
        bt = B // steps
    else:
        bt = batch_tile
        assert B % bt == 0
        steps = B // bt

    # Layout requirements of the flattened 2-D blocking / in-kernel slicing.
    assert S_p % 8 == 0 and S_c % 8 == 0 and NV % 8 == 0, (
        "sequence lengths and n_voxel*n_point must be multiples of 8")

    # Host-side weight prep: pre-transpose, pack fc1/fc2, expand fc3 to a
    # block-diagonal so the per-batch tail becomes one lane-wide matmul.
    wt_t = params["W_t"].T.astype(f32)                               # (D_p, H)
    wv_t = params["W_v"].T.astype(f32)                               # (D_c, H)
    w_c = params["W_c"].astype(f32)                                  # (NV, D_p+D_c)
    fcw12_t = jnp.stack([params["fc1_w"].T, params["fc2_w"].T]).astype(f32)   # (2, H, H)
    bias12 = jnp.stack([params["fc1_b"], params["fc2_b"]]).astype(f32)        # (2, H)
    fc3_bd = jnp.kron(jnp.eye(bt, dtype=f32), params["fc3_w"].T.astype(f32))  # (bt*H, bt*H)
    fc3_b = jnp.tile(params["fc3_b"].astype(f32), bt).reshape(1, bt * H)      # (1, bt*H)

    # Flatten batch into the sublane axis so each grid step DMAs one dense slab.
    pose2 = pose_embeds.reshape(B * S_p, D_p).astype(f32)
    pc2 = pc_embeds.reshape(B * S_c, D_c).astype(f32)

    kernel = functools.partial(_coattention_kernel, bt=bt, s_p=S_p, s_c=S_c)

    def full(arr):
        nd = arr.ndim
        return pl.BlockSpec(arr.shape, lambda i, _nd=nd: (0,) * _nd)

    out2 = pl.pallas_call(
        kernel,
        out_shape=jax.ShapeDtypeStruct((steps * NV, bt * H), f32),
        grid=(steps,),
        in_specs=[
            pl.BlockSpec((bt * S_p, D_p), lambda i: (i, 0)),
            pl.BlockSpec((bt * S_c, D_c), lambda i: (i, 0)),
            full(wt_t), full(wv_t), full(w_c),
            full(fcw12_t), full(bias12),
            full(fc3_bd), full(fc3_b),
        ],
        out_specs=pl.BlockSpec((NV, bt * H), lambda i: (i, 0)),
        compiler_params=pltpu.CompilerParams(dimension_semantics=("parallel",)),
    )(pose2, pc2, wt_t, wv_t, w_c, fcw12_t, bias12, fc3_bd, fc3_b)

    # Un-pack the lane-dense slab: lanes [b*H:(b+1)*H] of the rows written by
    # grid step i hold batch element i*bt + b.
    return (out2.reshape(steps, NV, bt, H)
                 .transpose(0, 2, 1, 3)
                 .reshape(B, NV, H))


# --------------------------- pure-JAX reference ---------------------------

def coattention_ref(pose_embeds, pc_embeds, p):
    # mirrors the PyTorch forward exactly
    pose_aw = jnp.einsum("hd,bds->bhs", p["W_t"], jnp.swapaxes(pose_embeds, 1, 2))
    pc_aw = jnp.einsum("hd,bds->bhs", p["W_v"], jnp.swapaxes(pc_embeds, 1, 2))
    pose_scores = jnp.tanh(pose_aw).transpose(0, 2, 1) @ p["fc1_w"].T + p["fc1_b"]
    pc_scores = jnp.tanh(pc_aw).transpose(0, 2, 1) @ p["fc2_w"].T + p["fc2_b"]
    pose_attn = jax.nn.softmax(pose_scores, axis=1)
    pc_attn = jax.nn.softmax(pc_scores, axis=1)
    att_pose = jnp.swapaxes(pose_embeds, 1, 2) @ pose_attn
    att_pc = jnp.swapaxes(pc_embeds, 1, 2) @ pc_attn
    combined = jnp.concatenate([att_pose, att_pc], axis=1)
    m = jnp.einsum("nd,bdh->bnh", p["W_c"], combined)
    z = m @ p["fc3_w"].T + p["fc3_b"]
    return z * jax.nn.sigmoid(z)


# ---------------------------------- main ----------------------------------

if __name__ == "__main__":
    # small shapes consistent with the module
    B = 8
    pose_seq_len, num_regions = 8, 16
    pose_embed_size, pc_embed_size = 16, 24
    hidden_size = 32
    n_voxel, n_point = 5, 8          # NV = 40

    key = jax.random.PRNGKey(0)
    ks = jax.random.split(key, 10)

    params = {
        # torch.randn-style parameters
        "W_t": jax.random.normal(ks[0], (hidden_size, pose_embed_size), jnp.float32),
        "W_v": jax.random.normal(ks[1], (hidden_size, pc_embed_size), jnp.float32),
        "W_c": jax.random.normal(ks[2], (n_voxel * n_point,
                                         pose_embed_size + pc_embed_size), jnp.float32),
        # Linear layers (deterministic synthetic init, scaled by 1/sqrt(fan_in))
        "fc1_w": jax.random.normal(ks[3], (hidden_size, hidden_size), jnp.float32)
                 / jnp.sqrt(hidden_size),
        "fc1_b": jax.random.normal(ks[4], (hidden_size,), jnp.float32) * 0.1,
        "fc2_w": jax.random.normal(ks[5], (hidden_size, hidden_size), jnp.float32)
                 / jnp.sqrt(hidden_size),
        "fc2_b": jax.random.normal(ks[6], (hidden_size,), jnp.float32) * 0.1,
        "fc3_w": jax.random.normal(ks[7], (hidden_size, hidden_size), jnp.float32)
                 / jnp.sqrt(hidden_size),
        "fc3_b": jax.random.normal(ks[8], (hidden_size,), jnp.float32) * 0.1,
    }

    kx = jax.random.split(ks[9], 2)
    pose_embeds = jax.random.normal(kx[0], (B, pose_seq_len, pose_embed_size), jnp.float32)
    pc_embeds = jax.random.normal(kx[1], (B, num_regions, pc_embed_size), jnp.float32)

    out = coattention_pallas(pose_embeds, pc_embeds, params)
    out = jax.block_until_ready(out)

    ref = coattention_ref(pose_embeds, pc_embeds, params)
    np.testing.assert_allclose(np.asarray(out), np.asarray(ref), rtol=2e-2, atol=2e-2)
    assert out.shape == (B, n_voxel * n_point, hidden_size)

    print("KERNEL_OK")
</pallas_src>

<mosaic_0001>
module attributes {stable_mosaic.version = 11 : i64} {
  func.func @_coattention_kernel(%arg0: i32, %arg1: memref<64x16xf32, #tpu.memory_space<vmem>>, %arg2: memref<128x24xf32, #tpu.memory_space<vmem>>, %arg3: memref<16x32xf32, #tpu.memory_space<vmem>>, %arg4: memref<24x32xf32, #tpu.memory_space<vmem>>, %arg5: memref<40x40xf32, #tpu.memory_space<vmem>>, %arg6: memref<2x32x32xf32, #tpu.memory_space<vmem>>, %arg7: memref<2x32xf32, #tpu.memory_space<vmem>>, %arg8: memref<256x256xf32, #tpu.memory_space<vmem>>, %arg9: memref<1x256xf32, #tpu.memory_space<vmem>>, %arg10: memref<40x256xf32, #tpu.memory_space<vmem>>) attributes {dimension_semantics = [#tpu.dimension_semantics<parallel>], iteration_bounds = array<i64: 1>, scalar_prefetch = 0 : i64, scratch_operands = 0 : i64, tpu.core_type = #tpu.core_type<tc>, window_params = [{transform_indices = @transform_0, window_bounds = array<i64: 64, 16>}, {transform_indices = @transform_1, window_bounds = array<i64: 128, 24>}, {pipeline_mode = #tpu.pipeline_mode<synchronous>, transform_indices = @transform_2, window_bounds = array<i64: 16, 32>}, {pipeline_mode = #tpu.pipeline_mode<synchronous>, transform_indices = @transform_3, window_bounds = array<i64: 24, 32>}, {pipeline_mode = #tpu.pipeline_mode<synchronous>, transform_indices = @transform_4, window_bounds = array<i64: 40, 40>}, {pipeline_mode = #tpu.pipeline_mode<synchronous>, transform_indices = @transform_5, window_bounds = array<i64: 2, 32, 32>}, {pipeline_mode = #tpu.pipeline_mode<synchronous>, transform_indices = @transform_6, window_bounds = array<i64: 2, 32>}, {pipeline_mode = #tpu.pipeline_mode<synchronous>, transform_indices = @transform_7, window_bounds = array<i64: 256, 256>}, {pipeline_mode = #tpu.pipeline_mode<synchronous>, transform_indices = @transform_8, window_bounds = array<i64: 1, 256>}, {transform_indices = @transform_9, window_bounds = array<i64: 40, 256>}]} {
    %c0 = arith.constant 0 : index
    %c0_0 = arith.constant 0 : index
    %0 = vector.load %arg1[%c0, %c0_0] : memref<64x16xf32, #tpu.memory_space<vmem>>, vector<64x16xf32>
    %c0_1 = arith.constant 0 : index
    %c0_2 = arith.constant 0 : index
    %1 = vector.load %arg2[%c0_1, %c0_2] : memref<128x24xf32, #tpu.memory_space<vmem>>, vector<128x24xf32>
    %c0_3 = arith.constant 0 : index
    %c0_4 = arith.constant 0 : index
    %2 = vector.load %arg5[%c0_3, %c0_4] : memref<40x40xf32, #tpu.memory_space<vmem>>, vector<40x40xf32>
    %c0_5 = arith.constant 0 : index
    %c0_6 = arith.constant 0 : index
    %c0_7 = arith.constant 0 : index
    %3 = vector.load %arg6[%c0_5, %c0_6, %c0_7] : memref<2x32x32xf32, #tpu.memory_space<vmem>>, vector<1x32x32xf32>
    %4 = vector.shape_cast %3 : vector<1x32x32xf32> to vector<32x32xf32>
    %c1 = arith.constant 1 : index
    %c0_8 = arith.constant 0 : index
    %c0_9 = arith.constant 0 : index
    %5 = vector.load %arg6[%c1, %c0_8, %c0_9] : memref<2x32x32xf32, #tpu.memory_space<vmem>>, vector<1x32x32xf32>
    %6 = vector.shape_cast %5 : vector<1x32x32xf32> to vector<32x32xf32>
    %c0_10 = arith.constant 0 : index
    %c0_11 = arith.constant 0 : index
    %7 = vector.load %arg7[%c0_10, %c0_11] : memref<2x32xf32, #tpu.memory_space<vmem>>, vector<1x32xf32>
    %c1_12 = arith.constant 1 : index
    %c0_13 = arith.constant 0 : index
    %8 = vector.load %arg7[%c1_12, %c0_13] : memref<2x32xf32, #tpu.memory_space<vmem>>, vector<1x32xf32>
    %c0_14 = arith.constant 0 : index
    %c0_15 = arith.constant 0 : index
    %9 = vector.load %arg3[%c0_14, %c0_15] : memref<16x32xf32, #tpu.memory_space<vmem>>, vector<16x32xf32>
    %cst = arith.constant dense<0.000000e+00> : vector<64x32xf32>
    %10 = tpu.matmul %0, %9, %cst {dimension_numbers = #tpu.dot_dimension_numbers<[1], [0], [0], [1], [0, 0, 1, 1], [], []>} : vector<64x16xf32>, vector<16x32xf32>, vector<64x32xf32> -> vector<64x32xf32>
    %11 = math.tanh %10 : vector<64x32xf32>
    %c0_16 = arith.constant 0 : index
    %c0_17 = arith.constant 0 : index
    %12 = vector.load %arg4[%c0_16, %c0_17] : memref<24x32xf32, #tpu.memory_space<vmem>>, vector<24x32xf32>
    %cst_18 = arith.constant dense<0.000000e+00> : vector<128x32xf32>
    %13 = tpu.matmul %1, %12, %cst_18 {dimension_numbers = #tpu.dot_dimension_numbers<[1], [0], [0], [1], [0, 0, 1, 1], [], []>} : vector<128x24xf32>, vector<24x32xf32>, vector<128x32xf32> -> vector<128x32xf32>
    %14 = math.tanh %13 : vector<128x32xf32>
    %cst_19 = arith.constant dense<0.000000e+00> : vector<64x32xf32>
    %15 = tpu.matmul %11, %4, %cst_19 {dimension_numbers = #tpu.dot_dimension_numbers<[1], [0], [0], [1], [0, 0, 1, 1], [], []>} : vector<64x32xf32>, vector<32x32xf32>, vector<64x32xf32> -> vector<64x32xf32>
    %16 = vector.broadcast %7 : vector<1x32xf32> to vector<64x32xf32>
    %17 = arith.addf %15, %16 : vector<64x32xf32>
    %cst_20 = arith.constant dense<0.000000e+00> : vector<128x32xf32>
    %18 = tpu.matmul %14, %6, %cst_20 {dimension_numbers = #tpu.dot_dimension_numbers<[1], [0], [0], [1], [0, 0, 1, 1], [], []>} : vector<128x32xf32>, vector<32x32xf32>, vector<128x32xf32> -> vector<128x32xf32>
    %19 = vector.broadcast %8 : vector<1x32xf32> to vector<128x32xf32>
    %20 = arith.addf %18, %19 : vector<128x32xf32>
    %21 = vector.shape_cast %17 : vector<64x32xf32> to vector<8x8x32xf32>
    %cst_21 = arith.constant dense<0xFF800000> : vector<8x32xf32>
    %22 = vector.multi_reduction <maximumf>, %21, %cst_21 [1] : vector<8x8x32xf32> to vector<8x32xf32>
    %23 = vector.shape_cast %22 : vector<8x32xf32> to vector<8x1x32xf32>
    %24 = vector.broadcast %23 : vector<8x1x32xf32> to vector<8x8x32xf32>
    %25 = arith.subf %21, %24 : vector<8x8x32xf32>
    %26 = math.exp %25 : vector<8x8x32xf32>
    %cst_22 = arith.constant dense<0.000000e+00> : vector<8x32xf32>
    %27 = vector.multi_reduction <add>, %26, %cst_22 [1] : vector<8x8x32xf32> to vector<8x32xf32>
    %28 = vector.shape_cast %27 : vector<8x32xf32> to vector<8x1x32xf32>
    %29 = tpu.reciprocal %28 : vector<8x1x32xf32> -> vector<8x1x32xf32>
    %30 = vector.broadcast %29 : vector<8x1x32xf32> to vector<8x8x32xf32>
    %31 = arith.mulf %26, %30 : vector<8x8x32xf32>
    %32 = vector.shape_cast %31 : vector<8x8x32xf32> to vector<64x32xf32>
    %33 = vector.shape_cast %20 : vector<128x32xf32> to vector<8x16x32xf32>
    %cst_23 = arith.constant dense<0xFF800000> : vector<8x32xf32>
    %34 = vector.multi_reduction <maximumf>, %33, %cst_23 [1] : vector<8x16x32xf32> to vector<8x32xf32>
    %35 = vector.shape_cast %34 : vector<8x32xf32> to vector<8x1x32xf32>
    %36 = vector.broadcast %35 : vector<8x1x32xf32> to vector<8x16x32xf32>
    %37 = arith.subf %33, %36 : vector<8x16x32xf32>
    %38 = math.exp %37 : vector<8x16x32xf32>
    %cst_24 = arith.constant dense<0.000000e+00> : vector<8x32xf32>
    %39 = vector.multi_reduction <add>, %38, %cst_24 [1] : vector<8x16x32xf32> to vector<8x32xf32>
    %40 = vector.shape_cast %39 : vector<8x32xf32> to vector<8x1x32xf32>
    %41 = tpu.reciprocal %40 : vector<8x1x32xf32> -> vector<8x1x32xf32>
    %42 = vector.broadcast %41 : vector<8x1x32xf32> to vector<8x16x32xf32>
    %43 = arith.mulf %38, %42 : vector<8x16x32xf32>
    %44 = vector.shape_cast %43 : vector<8x16x32xf32> to vector<128x32xf32>
    %45 = vector.extract_strided_slice %0 {offsets = [0, 0], sizes = [8, 16], strides = [1, 1]} : vector<64x16xf32> to vector<8x16xf32>
    %46 = vector.extract_strided_slice %1 {offsets = [0, 0], sizes = [16, 24], strides = [1, 1]} : vector<128x24xf32> to vector<16x24xf32>
    %47 = vector.extract_strided_slice %32 {offsets = [0, 0], sizes = [8, 32], strides = [1, 1]} : vector<64x32xf32> to vector<8x32xf32>
    %cst_25 = arith.constant dense<0.000000e+00> : vector<16x32xf32>
    %48 = tpu.matmul %45, %47, %cst_25 {dimension_numbers = #tpu.dot_dimension_numbers<[0], [0], [1], [1], [0, 1, 1, 1], [], []>} : vector<8x16xf32>, vector<8x32xf32>, vector<16x32xf32> -> vector<16x32xf32>
    %49 = vector.extract_strided_slice %44 {offsets = [0, 0], sizes = [16, 32], strides = [1, 1]} : vector<128x32xf32> to vector<16x32xf32>
    %cst_26 = arith.constant dense<0.000000e+00> : vector<24x32xf32>
    %50 = tpu.matmul %46, %49, %cst_26 {dimension_numbers = #tpu.dot_dimension_numbers<[0], [0], [1], [1], [0, 1, 1, 1], [], []>} : vector<16x24xf32>, vector<16x32xf32>, vector<24x32xf32> -> vector<24x32xf32>
    %51 = tpu.concatenate %48, %50 in 0 : vector<16x32xf32>, vector<24x32xf32> -> vector<40x32xf32>
    %52 = vector.extract_strided_slice %0 {offsets = [8, 0], sizes = [8, 16], strides = [1, 1]} : vector<64x16xf32> to vector<8x16xf32>
    %53 = vector.extract_strided_slice %1 {offsets = [16, 0], sizes = [16, 24], strides = [1, 1]} : vector<128x24xf32> to vector<16x24xf32>
    %54 = vector.extract_strided_slice %32 {offsets = [8, 0], sizes = [8, 32], strides = [1, 1]} : vector<64x32xf32> to vector<8x32xf32>
    %cst_27 = arith.constant dense<0.000000e+00> : vector<16x32xf32>
    %55 = tpu.matmul %52, %54, %cst_27 {dimension_numbers = #tpu.dot_dimension_numbers<[0], [0], [1], [1], [0, 1, 1, 1], [], []>} : vector<8x16xf32>, vector<8x32xf32>, vector<16x32xf32> -> vector<16x32xf32>
    %56 = vector.extract_strided_slice %44 {offsets = [16, 0], sizes = [16, 32], strides = [1, 1]} : vector<128x32xf32> to vector<16x32xf32>
    %cst_28 = arith.constant dense<0.000000e+00> : vector<24x32xf32>
    %57 = tpu.matmul %53, %56, %cst_28 {dimension_numbers = #tpu.dot_dimension_numbers<[0], [0], [1], [1], [0, 1, 1, 1], [], []>} : vector<16x24xf32>, vector<16x32xf32>, vector<24x32xf32> -> vector<24x32xf32>
    %58 = tpu.concatenate %55, %57 in 0 : vector<16x32xf32>, vector<24x32xf32> -> vector<40x32xf32>
    %59 = vector.extract_strided_slice %0 {offsets = [16, 0], sizes = [8, 16], strides = [1, 1]} : vector<64x16xf32> to vector<8x16xf32>
    %60 = vector.extract_strided_slice %1 {offsets = [32, 0], sizes = [16, 24], strides = [1, 1]} : vector<128x24xf32> to vector<16x24xf32>
    %61 = vector.extract_strided_slice %32 {offsets = [16, 0], sizes = [8, 32], strides = [1, 1]} : vector<64x32xf32> to vector<8x32xf32>
    %cst_29 = arith.constant dense<0.000000e+00> : vector<16x32xf32>
    %62 = tpu.matmul %59, %61, %cst_29 {dimension_numbers = #tpu.dot_dimension_numbers<[0], [0], [1], [1], [0, 1, 1, 1], [], []>} : vector<8x16xf32>, vector<8x32xf32>, vector<16x32xf32> -> vector<16x32xf32>
    %63 = vector.extract_strided_slice %44 {offsets = [32, 0], sizes = [16, 32], strides = [1, 1]} : vector<128x32xf32> to vector<16x32xf32>
    %cst_30 = arith.constant dense<0.000000e+00> : vector<24x32xf32>
    %64 = tpu.matmul %60, %63, %cst_30 {dimension_numbers = #tpu.dot_dimension_numbers<[0], [0], [1], [1], [0, 1, 1, 1], [], []>} : vector<16x24xf32>, vector<16x32xf32>, vector<24x32xf32> -> vector<24x32xf32>
    %65 = tpu.concatenate %62, %64 in 0 : vector<16x32xf32>, vector<24x32xf32> -> vector<40x32xf32>
    %66 = vector.extract_strided_slice %0 {offsets = [24, 0], sizes = [8, 16], strides = [1, 1]} : vector<64x16xf32> to vector<8x16xf32>
    %67 = vector.extract_strided_slice %1 {offsets = [48, 0], sizes = [16, 24], strides = [1, 1]} : vector<128x24xf32> to vector<16x24xf32>
    %68 = vector.extract_strided_slice %32 {offsets = [24, 0], sizes = [8, 32], strides = [1, 1]} : vector<64x32xf32> to vector<8x32xf32>
    %cst_31 = arith.constant dense<0.000000e+00> : vector<16x32xf32>
    %69 = tpu.matmul %66, %68, %cst_31 {dimension_numbers = #tpu.dot_dimension_numbers<[0], [0], [1], [1], [0, 1, 1, 1], [], []>} : vector<8x16xf32>, vector<8x32xf32>, vector<16x32xf32> -> vector<16x32xf32>
    %70 = vector.extract_strided_slice %44 {offsets = [48, 0], sizes = [16, 32], strides = [1, 1]} : vector<128x32xf32> to vector<16x32xf32>
    %cst_32 = arith.constant dense<0.000000e+00> : vector<24x32xf32>
    %71 = tpu.matmul %67, %70, %cst_32 {dimension_numbers = #tpu.dot_dimension_numbers<[0], [0], [1], [1], [0, 1, 1, 1], [], []>} : vector<16x24xf32>, vector<16x32xf32>, vector<24x32xf32> -> vector<24x32xf32>
    %72 = tpu.concatenate %69, %71 in 0 : vector<16x32xf32>, vector<24x32xf32> -> vector<40x32xf32>
    %73 = vector.extract_strided_slice %0 {offsets = [32, 0], sizes = [8, 16], strides = [1, 1]} : vector<64x16xf32> to vector<8x16xf32>
    %74 = vector.extract_strided_slice %1 {offsets = [64, 0], sizes = [16, 24], strides = [1, 1]} : vector<128x24xf32> to vector<16x24xf32>
    %75 = vector.extract_strided_slice %32 {offsets = [32, 0], sizes = [8, 32], strides = [1, 1]} : vector<64x32xf32> to vector<8x32xf32>
    %cst_33 = arith.constant dense<0.000000e+00> : vector<16x32xf32>
    %76 = tpu.matmul %73, %75, %cst_33 {dimension_numbers = #tpu.dot_dimension_numbers<[0], [0], [1], [1], [0, 1, 1, 1], [], []>} : vector<8x16xf32>, vector<8x32xf32>, vector<16x32xf32> -> vector<16x32xf32>
    %77 = vector.extract_strided_slice %44 {offsets = [64, 0], sizes = [16, 32], strides = [1, 1]} : vector<128x32xf32> to vector<16x32xf32>
    %cst_34 = arith.constant dense<0.000000e+00> : vector<24x32xf32>
    %78 = tpu.matmul %74, %77, %cst_34 {dimension_numbers = #tpu.dot_dimension_numbers<[0], [0], [1], [1], [0, 1, 1, 1], [], []>} : vector<16x24xf32>, vector<16x32xf32>, vector<24x32xf32> -> vector<24x32xf32>
    %79 = tpu.concatenate %76, %78 in 0 : vector<16x32xf32>, vector<24x32xf32> -> vector<40x32xf32>
    %80 = vector.extract_strided_slice %0 {offsets = [40, 0], sizes = [8, 16], strides = [1, 1]} : vector<64x16xf32> to vector<8x16xf32>
    %81 = vector.extract_strided_slice %1 {offsets = [80, 0], sizes = [16, 24], strides = [1, 1]} : vector<128x24xf32> to vector<16x24xf32>
    %82 = vector.extract_strided_slice %32 {offsets = [40, 0], sizes = [8, 32], strides = [1, 1]} : vector<64x32xf32> to vector<8x32xf32>
    %cst_35 = arith.constant dense<0.000000e+00> : vector<16x32xf32>
    %83 = tpu.matmul %80, %82, %cst_35 {dimension_numbers = #tpu.dot_dimension_numbers<[0], [0], [1], [1], [0, 1, 1, 1], [], []>} : vector<8x16xf32>, vector<8x32xf32>, vector<16x32xf32> -> vector<16x32xf32>
    %84 = vector.extract_strided_slice %44 {offsets = [80, 0], sizes = [16, 32], strides = [1, 1]} : vector<128x32xf32> to vector<16x32xf32>
    %cst_36 = arith.constant dense<0.000000e+00> : vector<24x32xf32>
    %85 = tpu.matmul %81, %84, %cst_36 {dimension_numbers = #tpu.dot_dimension_numbers<[0], [0], [1], [1], [0, 1, 1, 1], [], []>} : vector<16x24xf32>, vector<16x32xf32>, vector<24x32xf32> -> vector<24x32xf32>
    %86 = tpu.concatenate %83, %85 in 0 : vector<16x32xf32>, vector<24x32xf32> -> vector<40x32xf32>
    %87 = vector.extract_strided_slice %0 {offsets = [48, 0], sizes = [8, 16], strides = [1, 1]} : vector<64x16xf32> to vector<8x16xf32>
    %88 = vector.extract_strided_slice %1 {offsets = [96, 0], sizes = [16, 24], strides = [1, 1]} : vector<128x24xf32> to vector<16x24xf32>
    %89 = vector.extract_strided_slice %32 {offsets = [48, 0], sizes = [8, 32], strides = [1, 1]} : vector<64x32xf32> to vector<8x32xf32>
    %cst_37 = arith.constant dense<0.000000e+00> : vector<16x32xf32>
    %90 = tpu.matmul %87, %89, %cst_37 {dimension_numbers = #tpu.dot_dimension_numbers<[0], [0], [1], [1], [0, 1, 1, 1], [], []>} : vector<8x16xf32>, vector<8x32xf32>, vector<16x32xf32> -> vector<16x32xf32>
    %91 = vector.extract_strided_slice %44 {offsets = [96, 0], sizes = [16, 32], strides = [1, 1]} : vector<128x32xf32> to vector<16x32xf32>
    %cst_38 = arith.constant dense<0.000000e+00> : vector<24x32xf32>
    %92 = tpu.matmul %88, %91, %cst_38 {dimension_numbers = #tpu.dot_dimension_numbers<[0], [0], [1], [1], [0, 1, 1, 1], [], []>} : vector<16x24xf32>, vector<16x32xf32>, vector<24x32xf32> -> vector<24x32xf32>
    %93 = tpu.concatenate %90, %92 in 0 : vector<16x32xf32>, vector<24x32xf32> -> vector<40x32xf32>
    %94 = vector.extract_strided_slice %0 {offsets = [56, 0], sizes = [8, 16], strides = [1, 1]} : vector<64x16xf32> to vector<8x16xf32>
    %95 = vector.extract_strided_slice %1 {offsets = [112, 0], sizes = [16, 24], strides = [1, 1]} : vector<128x24xf32> to vector<16x24xf32>
    %96 = vector.extract_strided_slice %32 {offsets = [56, 0], sizes = [8, 32], strides = [1, 1]} : vector<64x32xf32> to vector<8x32xf32>
    %cst_39 = arith.constant dense<0.000000e+00> : vector<16x32xf32>
    %97 = tpu.matmul %94, %96, %cst_39 {dimension_numbers = #tpu.dot_dimension_numbers<[0], [0], [1], [1], [0, 1, 1, 1], [], []>} : vector<8x16xf32>, vector<8x32xf32>, vector<16x32xf32> -> vector<16x32xf32>
    %98 = vector.extract_strided_slice %44 {offsets = [112, 0], sizes = [16, 32], strides = [1, 1]} : vector<128x32xf32> to vector<16x32xf32>
    %cst_40 = arith.constant dense<0.000000e+00> : vector<24x32xf32>
    %99 = tpu.matmul %95, %98, %cst_40 {dimension_numbers = #tpu.dot_dimension_numbers<[0], [0], [1], [1], [0, 1, 1, 1], [], []>} : vector<16x24xf32>, vector<16x32xf32>, vector<24x32xf32> -> vector<24x32xf32>
    %100 = tpu.concatenate %97, %99 in 0 : vector<16x32xf32>, vector<24x32xf32> -> vector<40x32xf32>
    %101 = tpu.concatenate %51, %58, %65, %72, %79, %86, %93, %100 in 1 : vector<40x32xf32>, vector<40x32xf32>, vector<40x32xf32>, vector<40x32xf32>, vector<40x32xf32>, vector<40x32xf32>, vector<40x32xf32>, vector<40x32xf32> -> vector<40x256xf32>
    %cst_41 = arith.constant dense<0.000000e+00> : vector<40x256xf32>
    %102 = tpu.matmul %2, %101, %cst_41 {dimension_numbers = #tpu.dot_dimension_numbers<[1], [0], [0], [1], [0, 0, 1, 1], [], []>} : vector<40x40xf32>, vector<40x256xf32>, vector<40x256xf32> -> vector<40x256xf32>
    %c0_42 = arith.constant 0 : index
    %c0_43 = arith.constant 0 : index
    %103 = vector.load %arg8[%c0_42, %c0_43] : memref<256x256xf32, #tpu.memory_space<vmem>>, vector<256x256xf32>
    %cst_44 = arith.constant dense<0.000000e+00> : vector<40x256xf32>
    %104 = tpu.matmul %102, %103, %cst_44 {dimension_numbers = #tpu.dot_dimension_numbers<[1], [0], [0], [1], [0, 0, 1, 1], [], []>} : vector<40x256xf32>, vector<256x256xf32>, vector<40x256xf32> -> vector<40x256xf32>
    %c0_45 = arith.constant 0 : index
    %c0_46 = arith.constant 0 : index
    %105 = vector.load %arg9[%c0_45, %c0_46] : memref<1x256xf32, #tpu.memory_space<vmem>>, vector<1x256xf32>
    %106 = vector.broadcast %105 : vector<1x256xf32> to vector<40x256xf32>
    %107 = arith.addf %104, %106 : vector<40x256xf32>
    %108 = arith.negf %107 : vector<40x256xf32>
    %109 = math.exp %108 : vector<40x256xf32>
    %cst_47 = arith.constant 1.000000e+00 : f32
    %110 = vector.broadcast %cst_47 : f32 to vector<40x256xf32>
    %111 = arith.addf %110, %109 : vector<40x256xf32>
    %112 = arith.divf %110, %111 : vector<40x256xf32>
    %113 = arith.mulf %107, %112 : vector<40x256xf32>
    %c0_48 = arith.constant 0 : index
    %c0_49 = arith.constant 0 : index
    %114 = vector.load %arg10[%c0_48, %c0_49] : memref<40x256xf32, #tpu.memory_space<vmem>>, vector<40x256xf32>
    tpu.vector_store %arg10[%c0_48, %c0_49], %113 {strides = array<i32>} : memref<40x256xf32, #tpu.memory_space<vmem>>, vector<40x256xf32>,
    return
  }
  func.func @transform_0(%arg0: i32) -> (i32, i32) {
    %c0_i32 = arith.constant 0 : i32
    %c0_i32_0 = arith.constant 0 : i32
    return %arg0, %c0_i32 : i32, i32
  }
  func.func @transform_1(%arg0: i32) -> (i32, i32) {
    %c0_i32 = arith.constant 0 : i32
    %c0_i32_0 = arith.constant 0 : i32
    return %arg0, %c0_i32 : i32, i32
  }
  func.func @transform_2(%arg0: i32) -> (i32, i32) {
    %c0_i32 = arith.constant 0 : i32
    %c0_i32_0 = arith.constant 0 : i32
    %c0_i32_1 = arith.constant 0 : i32
    return %c0_i32, %c0_i32_0 : i32, i32
  }
  func.func @transform_3(%arg0: i32) -> (i32, i32) {
    %c0_i32 = arith.constant 0 : i32
    %c0_i32_0 = arith.constant 0 : i32
    %c0_i32_1 = arith.constant 0 : i32
    return %c0_i32, %c0_i32_0 : i32, i32
  }
  func.func @transform_4(%arg0: i32) -> (i32, i32) {
    %c0_i32 = arith.constant 0 : i32
    %c0_i32_0 = arith.constant 0 : i32
    %c0_i32_1 = arith.constant 0 : i32
    return %c0_i32, %c0_i32_0 : i32, i32
  }
  func.func @transform_5(%arg0: i32) -> (i32, i32, i32) {
    %c0_i32 = arith.constant 0 : i32
    %c0_i32_0 = arith.constant 0 : i32
    %c0_i32_1 = arith.constant 0 : i32
    %c0_i32_2 = arith.constant 0 : i32
    return %c0_i32, %c0_i32_0, %c0_i32_1 : i32, i32, i32
  }
  func.func @transform_6(%arg0: i32) -> (i32, i32) {
    %c0_i32 = arith.constant 0 : i32
    %c0_i32_0 = arith.constant 0 : i32
    %c0_i32_1 = arith.constant 0 : i32
    return %c0_i32, %c0_i32_0 : i32, i32
  }
  func.func @transform_7(%arg0: i32) -> (i32, i32) {
    %c0_i32 = arith.constant 0 : i32
    %c0_i32_0 = arith.constant 0 : i32
    %c0_i32_1 = arith.constant 0 : i32
    return %c0_i32, %c0_i32_0 : i32, i32
  }
  func.func @transform_8(%arg0: i32) -> (i32, i32) {
    %c0_i32 = arith.constant 0 : i32
    %c0_i32_0 = arith.constant 0 : i32
    %c0_i32_1 = arith.constant 0 : i32
    return %c0_i32, %c0_i32_0 : i32, i32
  }
  func.func @transform_9(%arg0: i32) -> (i32, i32) {
    %c0_i32 = arith.constant 0 : i32
    %c0_i32_0 = arith.constant 0 : i32
    return %arg0, %c0_i32 : i32, i32
  }
}

</mosaic_0001>

<llo_original>
// kernel: tpu_custom_call.1
$region0: #{tpu_custom_call.1}
  #allocation0 [shape = 'u32[]', space=smem, size = 0x4, offset = 0x4, fixed_abs, tag = 'smem constant byte address 0x4 - core index']
  #allocation1 [shape = 'u32[72,128]{1,0:T(1,128)}', space=vmem, size = 0x9000, scoped, tag = 'internal scratch']
  %s0 = inlined_call_operand.vmem [shape: f32[64,16], index: 0, kind: input, shape index: {}]
  %s1 = inlined_call_operand.vmem [shape: f32[128,24], index: 1, kind: input, shape index: {}]
  %s2 = inlined_call_operand.vmem [shape: f32[16,32], index: 2, kind: input, shape index: {}]
  %s3 = inlined_call_operand.vmem [shape: f32[24,32], index: 3, kind: input, shape index: {}]
  %s4 = inlined_call_operand.vmem [shape: f32[40,40], index: 4, kind: input, shape index: {}]
  %s5 = inlined_call_operand.vmem [shape: f32[2,32,32], index: 5, kind: input, shape index: {}]
  %s6 = inlined_call_operand.vmem [shape: f32[2,32], index: 6, kind: input, shape index: {}]
  %s7 = inlined_call_operand.hbm [shape: f32[256,256], index: 7, kind: input, shape index: {}]
  %s8 = inlined_call_operand.vmem [shape: f32[1,256], index: 8, kind: input, shape index: {}]
  %s9 = inlined_call_operand.hbm [shape: f32[40,256], index: 9, kind: output, shape index: {}]
  %s10 = sld [smem:[#allocation0]]
  $region50: #{tpu_custom_call.1} parent=0
    _
  %s12 = ssub.s32 1, %s10
  %s13 = scalar_select 0, %s12, %s10
  $region1: #{tpu_custom_call.1} parent=0
    #allocation2 [shape = 'u8[262144]{0}', space=vmem, size = 0x40000, scoped, tag = 'input window, operand 7, single buffered']
    #allocation3 [shape = 's32[1]{0}', space=sflag, size = 0x4, scoped, tag = 'scoped memory for tpu_custom_call.1']
    #allocation4 [shape = 's32[1]{0}', space=sflag, size = 0x4, scoped, tag = 'scoped memory for tpu_custom_call.1']
    #allocation5 [shape = 'u8[40960]{0}', space=vmem, size = 0xa000, scoped, tag = 'output window, operand 0, single buffered']
    %14 = vsyncpa [#allocation3], 0
    %15 = vsyncpa [#allocation4], 0
    // Predicated region
    $region2: #{tpu_custom_call.1} parent=1 // pred_check
      _
    $region3: #{tpu_custom_call.1} parent=1 // pred_check_branch
      %17 = sbr.rel (0) target = $region5
    $region4: #{tpu_custom_call.1} parent=1 // pred_region
      _
    $region5: #{tpu_custom_call.1} parent=1 // pred_fallthru
      _
    // Predicated region
    $region6: #{tpu_custom_call.1} parent=1 // pred_check
      _
    $region7: #{tpu_custom_call.1} parent=1 // pred_check_branch
      %19 = sbr.rel (0) target = $region9
    $region8: #{tpu_custom_call.1} parent=1 // pred_region
      _
    $region9: #{tpu_custom_call.1} parent=1 // pred_fallthru
      _
    // Predicated region
    $region10: #{tpu_custom_call.1} parent=1 // pred_check
      _
    $region11: #{tpu_custom_call.1} parent=1 // pred_check_branch
      %21 = sbr.rel (0) target = $region13
    $region12: #{tpu_custom_call.1} parent=1 // pred_region
      _
    $region13: #{tpu_custom_call.1} parent=1 // pred_fallthru
      _
    // Predicated region
    $region14: #{tpu_custom_call.1} parent=1 // pred_check
      _
    $region15: #{tpu_custom_call.1} parent=1 // pred_check_branch
      %23 = sbr.rel (0) target = $region17
    $region16: #{tpu_custom_call.1} parent=1 // pred_region
      _
    $region17: #{tpu_custom_call.1} parent=1 // pred_fallthru
      _
    // Predicated region
    $region18: #{tpu_custom_call.1} parent=1 // pred_check
      _
    $region19: #{tpu_custom_call.1} parent=1 // pred_check_branch
      %25 = sbr.rel (0) target = $region21
    $region20: #{tpu_custom_call.1} parent=1 // pred_region
      _
    $region21: #{tpu_custom_call.1} parent=1 // pred_fallthru
      _
    // Predicated region
    $region22: #{tpu_custom_call.1} parent=1 // pred_check
      _
    $region23: #{tpu_custom_call.1} parent=1 // pred_check_branch
      %27 = sbr.rel (0) target = $region25
    $region24: #{tpu_custom_call.1} parent=1 // pred_region
      _
    $region25: #{tpu_custom_call.1} parent=1 // pred_fallthru
      _
    // Predicated region
    $region26: #{tpu_custom_call.1} parent=1 // pred_check
      _
    $region27: #{tpu_custom_call.1} parent=1 // pred_check_branch
      %29 = sbr.rel (0) target = $region29
    $region28: #{tpu_custom_call.1} parent=1 // pred_region
      _
    $region29: #{tpu_custom_call.1} parent=1 // pred_fallthru
      _
    // Predicated region
    $region30: #{tpu_custom_call.1} parent=1 // pred_check
      _
    $region31: #{tpu_custom_call.1} parent=1 // pred_check_branch
      %31 = sbr.rel (0) target = $region33
    $region32: #{tpu_custom_call.1} parent=1 // pred_region
      %33 = vsyncadd [#allocation3], 0
      %s34 = sshll.u32 %s7, 4
      %s35 = int_to_ptr.hbm [resolvable:$true] %s34
      %s36 = sshll.u32 [#allocation2], 4
      %s37 = int_to_ptr.vmem [resolvable:$true] %s36
      %42 = dma.hbm_to_vmem [thread:$0]  %s35, 8192, %s37, [#allocation3], 256, 256, 16
    $region33: #{tpu_custom_call.1} parent=1 // pred_fallthru
      _
    // Predicated region
    $region34: #{tpu_custom_call.1} parent=1 // pred_check
      _
    $region35: #{tpu_custom_call.1} parent=1 // pred_check_branch
      %44 = sbr.rel (0) target = $region37
    $region36: #{tpu_custom_call.1} parent=1 // pred_region
      _
    $region37: #{tpu_custom_call.1} parent=1 // pred_fallthru
      _
    // Predicated region
    $region38: #{tpu_custom_call.1} parent=1 // pred_check
      _
    $region39: #{tpu_custom_call.1} parent=1 // pred_check_branch
      %46 = sbr.rel (0) target = $region41
    $region40: #{tpu_custom_call.1} parent=1 // pred_region
      %48 = dma.done [#allocation3], 8192
    $region41: #{tpu_custom_call.1} parent=1 // pred_fallthru
      _
    %v49 = vld [vmem:[%s0] sm:$0xff]
    %v50 = vld [vmem:[%s0 + $0x8] sm:$0xff]
    %v51 = vld [vmem:[%s0 + $0x10] sm:$0xff]
    %v52 = vld [vmem:[%s0 + $0x18] sm:$0xff]
    %v53 = vld [vmem:[%s0 + $0x20] sm:$0xff]
    %v54 = vld [vmem:[%s0 + $0x28] sm:$0xff]
    %v55 = vld [vmem:[%s0 + $0x30] sm:$0xff]
    %v56 = vld [vmem:[%s0 + $0x38] sm:$0xff]
    %v57 = vld [vmem:[%s1] sm:$0xff]
    %v58 = vld [vmem:[%s1 + $0x8] sm:$0xff]
    %v59 = vld [vmem:[%s1 + $0x10] sm:$0xff]
    %v60 = vld [vmem:[%s1 + $0x18] sm:$0xff]
    %v61 = vld [vmem:[%s1 + $0x20] sm:$0xff]
    %v62 = vld [vmem:[%s1 + $0x28] sm:$0xff]
    %v63 = vld [vmem:[%s1 + $0x30] sm:$0xff]
    %v64 = vld [vmem:[%s1 + $0x38] sm:$0xff]
    %v65 = vld [vmem:[%s1 + $0x40] sm:$0xff]
    %v66 = vld [vmem:[%s1 + $0x48] sm:$0xff]
    %v67 = vld [vmem:[%s1 + $0x50] sm:$0xff]
    %v68 = vld [vmem:[%s1 + $0x58] sm:$0xff]
    %v69 = vld [vmem:[%s1 + $0x60] sm:$0xff]
    %v70 = vld [vmem:[%s1 + $0x68] sm:$0xff]
    %v71 = vld [vmem:[%s1 + $0x70] sm:$0xff]
    %v72 = vld [vmem:[%s1 + $0x78] sm:$0xff]
    %v73 = vld [vmem:[%s4] sm:$0xff]
    %v74 = vld [vmem:[%s4 + $0x8] sm:$0xff]
    %v75 = vld [vmem:[%s4 + $0x10] sm:$0xff]
    %v76 = vld [vmem:[%s4 + $0x18] sm:$0xff]
    %v77 = vld [vmem:[%s4 + $0x20] sm:$0xff]
    %v78 = vld [vmem:[%s5] sm:$0xff]
    %v79 = vld [vmem:[%s5 + $0x8] sm:$0xff]
    %v80 = vld [vmem:[%s5 + $0x10] sm:$0xff]
    %v81 = vld [vmem:[%s5 + $0x18] sm:$0xff]
    %s82 = scalar_lea.vmem %s5, 32
    %v83 = vld [vmem:[%s82] sm:$0xff]
    %v84 = vld [vmem:[%s82 + $0x8] sm:$0xff]
    %v85 = vld [vmem:[%s82 + $0x10] sm:$0xff]
    %v86 = vld [vmem:[%s82 + $0x18] sm:$0xff]
    %v87 = vld [vmem:[%s6] sm:$0x1]
    %v88 = vld [vmem:[%s6 + $0x1] sm:$0x1]
    %v89 = vld [vmem:[%s2] sm:$0xff]
    %v90 = vld [vmem:[%s2 + $0x8] sm:$0xff]
    %vm91 = vcmask 130048
    %v93 = vsel %vm91, %v49, 0
    %v96 = vsel %vm91, %v50, 0
    %v99 = vsel %vm91, %v51, 0
    %v102 = vsel %vm91, %v52, 0
    %v105 = vsel %vm91, %v53, 0
    %v108 = vsel %vm91, %v54, 0
    %v111 = vsel %vm91, %v55, 0
    %v114 = vsel %vm91, %v56, 0
    %116 = vmatpush.msra.mxu0 0.0
    %117 = vmatpush.msra.mxu0 0.0
    %118 = vmatpush.msra.mxu0 0.0
    %119 = vmatpush.msra.mxu0 0.0
    %120 = vmatpush.msra.mxu0 0.0
    %121 = vmatpush.msra.mxu0 0.0
    %122 = vmatpush.msra.mxu0 0.0
    %123 = vmatpush.msra.mxu0 0.0
    %124 = vmatpush.msra.mxu0 0.0
    %125 = vmatpush.msra.mxu0 0.0
    %126 = vmatpush.msra.mxu0 0.0
    %127 = vmatpush.msra.mxu0 0.0
    %128 = vmatpush.msra.mxu0 0.0
    %129 = vmatpush.msra.mxu0 0.0
    %130 = vmatpush.msra.mxu0 %v90
    %131 = vmatpush.msra.mxu0 %v89
    %132 = vmatmul.f32.gmra.mxu0 %v93
    %v133 = vpop.f32.mrf.mxu0
    %v134 = vadd.f32 0.0, %v133
    %135 = vmatmul.f32.gmra.mxu0 %v96
    %v136 = vpop.f32.mrf.mxu0
    %v137 = vadd.f32 0.0, %v136
    %138 = vmatmul.f32.gmra.mxu0 %v99
    %v139 = vpop.f32.mrf.mxu0
    %v140 = vadd.f32 0.0, %v139
    %141 = vmatmul.f32.gmra.mxu0 %v102
    %v142 = vpop.f32.mrf.mxu0
    %v143 = vadd.f32 0.0, %v142
    %144 = vmatmul.f32.gmra.mxu0 %v105
    %v145 = vpop.f32.mrf.mxu0
    %v146 = vadd.f32 0.0, %v145
    %147 = vmatmul.f32.gmra.mxu0 %v108
    %v148 = vpop.f32.mrf.mxu0
    %v149 = vadd.f32 0.0, %v148
    %150 = vmatmul.f32.gmra.mxu0 %v111
    %v151 = vpop.f32.mrf.mxu0
    %v152 = vadd.f32 0.0, %v151
    %153 = vmatmul.f32.gmra.mxu0 %v114
    %v154 = vpop.f32.mrf.mxu0
    %v155 = vadd.f32 0.0, %v154
    %156 = vdwg.mxu0
    %v157 = vtanh.pop %v134
    %v158 = vtanh.pop %v137
    %v159 = vtanh.pop %v140
    %v160 = vtanh.pop %v143
    %v161 = vtanh.pop %v146
    %v162 = vtanh.pop %v149
    %v163 = vtanh.pop %v152
    %v164 = vtanh.pop %v155
    %v165 = vld [vmem:[%s3] sm:$0xff]
    %v166 = vld [vmem:[%s3 + $0x8] sm:$0xff]
    %v167 = vld [vmem:[%s3 + $0x10] sm:$0xff]
    %vm168 = vcmask 195584
    %v170 = vsel %vm168, %v57, 0
    %v173 = vsel %vm168, %v58, 0
    %v176 = vsel %vm168, %v59, 0
    %v179 = vsel %vm168, %v60, 0
    %v182 = vsel %vm168, %v61, 0
    %v185 = vsel %vm168, %v62, 0
    %v188 = vsel %vm168, %v63, 0
    %v191 = vsel %vm168, %v64, 0
    %v194 = vsel %vm168, %v65, 0
    %v197 = vsel %vm168, %v66, 0
    %v200 = vsel %vm168, %v67, 0
    %v203 = vsel %vm168, %v68, 0
    %v206 = vsel %vm168, %v69, 0
    %v209 = vsel %vm168, %v70, 0
    %v212 = vsel %vm168, %v71, 0
    %v215 = vsel %vm168, %v72, 0
    %217 = vmatpush.msra.mxu0 0.0
    %218 = vmatpush.msra.mxu0 0.0
    %219 = vmatpush.msra.mxu0 0.0
    %220 = vmatpush.msra.mxu0 0.0
    %221 = vmatpush.msra.mxu0 0.0
    %222 = vmatpush.msra.mxu0 0.0
    %223 = vmatpush.msra.mxu0 0.0
    %224 = vmatpush.msra.mxu0 0.0
    %225 = vmatpush.msra.mxu0 0.0
    %226 = vmatpush.msra.mxu0 0.0
    %227 = vmatpush.msra.mxu0 0.0
    %228 = vmatpush.msra.mxu0 0.0
    %229 = vmatpush.msra.mxu0 0.0
    %230 = vmatpush.msra.mxu0 %v167
    %231 = vmatpush.msra.mxu0 %v166
    %232 = vmatpush.msra.mxu0 %v165
    %233 = vmatmul.f32.gmra.mxu0 %v170
    %v234 = vpop.f32.mrf.mxu0
    %v235 = vadd.f32 0.0, %v234
    %236 = vmatmul.f32.gmra.mxu0 %v173
    %v237 = vpop.f32.mrf.mxu0
    %v238 = vadd.f32 0.0, %v237
    %239 = vmatmul.f32.gmra.mxu0 %v176
    %v240 = vpop.f32.mrf.mxu0
    %v241 = vadd.f32 0.0, %v240
    %242 = vmatmul.f32.gmra.mxu0 %v179
    %v243 = vpop.f32.mrf.mxu0
    %v244 = vadd.f32 0.0, %v243
    %245 = vmatmul.f32.gmra.mxu0 %v182
    %v246 = vpop.f32.mrf.mxu0
    %v247 = vadd.f32 0.0, %v246
    %248 = vmatmul.f32.gmra.mxu0 %v185
    %v249 = vpop.f32.mrf.mxu0
    %v250 = vadd.f32 0.0, %v249
    %251 = vmatmul.f32.gmra.mxu0 %v188
    %v252 = vpop.f32.mrf.mxu0
    %v253 = vadd.f32 0.0, %v252
    %254 = vmatmul.f32.gmra.mxu0 %v191
    %v255 = vpop.f32.mrf.mxu0
    %v256 = vadd.f32 0.0, %v255
    %257 = vmatmul.f32.gmra.mxu0 %v194
    %v258 = vpop.f32.mrf.mxu0
    %v259 = vadd.f32 0.0, %v258
    %260 = vmatmul.f32.gmra.mxu0 %v197
    %v261 = vpop.f32.mrf.mxu0
    %v262 = vadd.f32 0.0, %v261
    %263 = vmatmul.f32.gmra.mxu0 %v200
    %v264 = vpop.f32.mrf.mxu0
    %v265 = vadd.f32 0.0, %v264
    %266 = vmatmul.f32.gmra.mxu0 %v203
    %v267 = vpop.f32.mrf.mxu0
    %v268 = vadd.f32 0.0, %v267
    %269 = vmatmul.f32.gmra.mxu0 %v206
    %v270 = vpop.f32.mrf.mxu0
    %v271 = vadd.f32 0.0, %v270
    %272 = vmatmul.f32.gmra.mxu0 %v209
    %v273 = vpop.f32.mrf.mxu0
    %v274 = vadd.f32 0.0, %v273
    %275 = vmatmul.f32.gmra.mxu0 %v212
    %v276 = vpop.f32.mrf.mxu0
    %v277 = vadd.f32 0.0, %v276
    %278 = vmatmul.f32.gmra.mxu0 %v215
    %v279 = vpop.f32.mrf.mxu0
    %v280 = vadd.f32 0.0, %v279
    %281 = vdwg.mxu0
    %v282 = vtanh.pop %v235
    %v283 = vtanh.pop %v238
    %v284 = vtanh.pop %v241
    %v285 = vtanh.pop %v244
    %v286 = vtanh.pop %v247
    %v287 = vtanh.pop %v250
    %v288 = vtanh.pop %v253
    %v289 = vtanh.pop %v256
    %v290 = vtanh.pop %v259
    %v291 = vtanh.pop %v262
    %v292 = vtanh.pop %v265
    %v293 = vtanh.pop %v268
    %v294 = vtanh.pop %v271
    %v295 = vtanh.pop %v274
    %v296 = vtanh.pop %v277
    %v297 = vtanh.pop %v280
    %v298 = vperm.slane %v87, 0
    %vm299 = vcmask 261120
    %v301 = vsel %vm299, %v157, 0
    %v304 = vsel %vm299, %v158, 0
    %v307 = vsel %vm299, %v159, 0
    %v310 = vsel %vm299, %v160, 0
    %v313 = vsel %vm299, %v161, 0
    %v316 = vsel %vm299, %v162, 0
    %v319 = vsel %vm299, %v163, 0
    %v322 = vsel %vm299, %v164, 0
    %324 = vmatpush.msra.mxu0 0.0
    %325 = vmatpush.msra.mxu0 0.0
    %326 = vmatpush.msra.mxu0 0.0
    %327 = vmatpush.msra.mxu0 0.0
    %328 = vmatpush.msra.mxu0 0.0
    %329 = vmatpush.msra.mxu0 0.0
    %330 = vmatpush.msra.mxu0 0.0
    %331 = vmatpush.msra.mxu0 0.0
    %332 = vmatpush.msra.mxu0 0.0
    %333 = vmatpush.msra.mxu0 0.0
    %334 = vmatpush.msra.mxu0 0.0
    %335 = vmatpush.msra.mxu0 0.0
    %336 = vmatpush.msra.mxu0 %v81
    %337 = vmatpush.msra.mxu0 %v80
    %338 = vmatpush.msra.mxu0 %v79
    %339 = vmatpush.msra.mxu0 %v78
    %340 = vmatmul.f32.gmra.mxu0 %v301
    %v341 = vpop.f32.mrf.mxu0
    %v342 = vadd.f32 %v298, %v341
    %343 = vmatmul.f32.gmra.mxu0 %v304
    %v344 = vpop.f32.mrf.mxu0
    %v345 = vadd.f32 %v298, %v344
    %346 = vmatmul.f32.gmra.mxu0 %v307
    %v347 = vpop.f32.mrf.mxu0
    %v348 = vadd.f32 %v298, %v347
    %349 = vmatmul.f32.gmra.mxu0 %v310
    %v350 = vpop.f32.mrf.mxu0
    %v351 = vadd.f32 %v298, %v350
    %352 = vmatmul.f32.gmra.mxu0 %v313
    %v353 = vpop.f32.mrf.mxu0
    %v354 = vadd.f32 %v298, %v353
    %355 = vmatmul.f32.gmra.mxu0 %v316
    %v356 = vpop.f32.mrf.mxu0
    %v357 = vadd.f32 %v298, %v356
    %358 = vmatmul.f32.gmra.mxu0 %v319
    %v359 = vpop.f32.mrf.mxu0
    %v360 = vadd.f32 %v298, %v359
    %361 = vmatmul.f32.gmra.mxu0 %v322
    %v362 = vpop.f32.mrf.mxu0
    %v363 = vadd.f32 %v298, %v362
    %364 = vdwg.mxu0
    %v365 = vperm.slane %v88, 0
    %v367 = vsel %vm299, %v282, 0
    %v370 = vsel %vm299, %v283, 0
    %v373 = vsel %vm299, %v284, 0
    %v376 = vsel %vm299, %v285, 0
    %v379 = vsel %vm299, %v286, 0
    %v382 = vsel %vm299, %v287, 0
    %v385 = vsel %vm299, %v288, 0
    %v388 = vsel %vm299, %v289, 0
    %v391 = vsel %vm299, %v290, 0
    %v394 = vsel %vm299, %v291, 0
    %v397 = vsel %vm299, %v292, 0
    %v400 = vsel %vm299, %v293, 0
    %v403 = vsel %vm299, %v294, 0
    %v406 = vsel %vm299, %v295, 0
    %v409 = vsel %vm299, %v296, 0
    %v412 = vsel %vm299, %v297, 0
    %414 = vmatpush.msra.mxu0 0.0
    %415 = vmatpush.msra.mxu0 0.0
    %416 = vmatpush.msra.mxu0 0.0
    %417 = vmatpush.msra.mxu0 0.0
    %418 = vmatpush.msra.mxu0 0.0
    %419 = vmatpush.msra.mxu0 0.0
    %420 = vmatpush.msra.mxu0 0.0
    %421 = vmatpush.msra.mxu0 0.0
    %422 = vmatpush.msra.mxu0 0.0
    %423 = vmatpush.msra.mxu0 0.0
    %424 = vmatpush.msra.mxu0 0.0
    %425 = vmatpush.msra.mxu0 0.0
    %426 = vmatpush.msra.mxu0 %v86
    %427 = vmatpush.msra.mxu0 %v85
    %428 = vmatpush.msra.mxu0 %v84
    %429 = vmatpush.msra.mxu0 %v83
    %430 = vmatmul.f32.gmra.mxu0 %v367
    %v431 = vpop.f32.mrf.mxu0
    %v432 = vadd.f32 %v365, %v431
    %433 = vmatmul.f32.gmra.mxu0 %v370
    %v434 = vpop.f32.mrf.mxu0
    %v435 = vadd.f32 %v365, %v434
    %436 = vmatmul.f32.gmra.mxu0 %v373
    %v437 = vpop.f32.mrf.mxu0
    %v438 = vadd.f32 %v365, %v437
    %439 = vmatmul.f32.gmra.mxu0 %v376
    %v440 = vpop.f32.mrf.mxu0
    %v441 = vadd.f32 %v365, %v440
    %442 = vmatmul.f32.gmra.mxu0 %v379
    %v443 = vpop.f32.mrf.mxu0
    %v444 = vadd.f32 %v365, %v443
    %445 = vmatmul.f32.gmra.mxu0 %v382
    %v446 = vpop.f32.mrf.mxu0
    %v447 = vadd.f32 %v365, %v446
    %448 = vmatmul.f32.gmra.mxu0 %v385
    %v449 = vpop.f32.mrf.mxu0
    %v450 = vadd.f32 %v365, %v449
    %451 = vmatmul.f32.gmra.mxu0 %v388
    %v452 = vpop.f32.mrf.mxu0
    %v453 = vadd.f32 %v365, %v452
    %454 = vmatmul.f32.gmra.mxu0 %v391
    %v455 = vpop.f32.mrf.mxu0
    %v456 = vadd.f32 %v365, %v455
    %457 = vmatmul.f32.gmra.mxu0 %v394
    %v458 = vpop.f32.mrf.mxu0
    %v459 = vadd.f32 %v365, %v458
    %460 = vmatmul.f32.gmra.mxu0 %v397
    %v461 = vpop.f32.mrf.mxu0
    %v462 = vadd.f32 %v365, %v461
    %463 = vmatmul.f32.gmra.mxu0 %v400
    %v464 = vpop.f32.mrf.mxu0
    %v465 = vadd.f32 %v365, %v464
    %466 = vmatmul.f32.gmra.mxu0 %v403
    %v467 = vpop.f32.mrf.mxu0
    %v468 = vadd.f32 %v365, %v467
    %469 = vmatmul.f32.gmra.mxu0 %v406
    %v470 = vpop.f32.mrf.mxu0
    %v471 = vadd.f32 %v365, %v470
    %472 = vmatmul.f32.gmra.mxu0 %v409
    %v473 = vpop.f32.mrf.mxu0
    %v474 = vadd.f32 %v365, %v473
    %475 = vmatmul.f32.gmra.mxu0 %v412
    %v476 = vpop.f32.mrf.mxu0
    %v477 = vadd.f32 %v365, %v476
    %478 = vdwg.mxu0
    %v479 = vsel %vm299, %v342, -inf
    %v480 = vrot.slane %v479, 4
    %v481 = vmax.f32 %v479, %v480
    %v482 = vrot.slane %v481, 2
    %v483 = vmax.f32 %v481, %v482
    %v484 = vrot.slane %v483, 1
    %v485 = vmax.f32 %v483, %v484
    %v486 = vsel %vm299, %v345, -inf
    %v487 = vrot.slane %v486, 4
    %v488 = vmax.f32 %v486, %v487
    %v489 = vrot.slane %v488, 2
    %v490 = vmax.f32 %v488, %v489
    %v491 = vrot.slane %v490, 1
    %v492 = vmax.f32 %v490, %v491
    %v493 = vsel %vm299, %v348, -inf
    %v494 = vrot.slane %v493, 4
    %v495 = vmax.f32 %v493, %v494
    %v496 = vrot.slane %v495, 2
    %v497 = vmax.f32 %v495, %v496
    %v498 = vrot.slane %v497, 1
    %v499 = vmax.f32 %v497, %v498
    %v500 = vsel %vm299, %v351, -inf
    %v501 = vrot.slane %v500, 4
    %v502 = vmax.f32 %v500, %v501
    %v503 = vrot.slane %v502, 2
    %v504 = vmax.f32 %v502, %v503
    %v505 = vrot.slane %v504, 1
    %v506 = vmax.f32 %v504, %v505
    %v507 = vsel %vm299, %v354, -inf
    %v508 = vrot.slane %v507, 4
    %v509 = vmax.f32 %v507, %v508
    %v510 = vrot.slane %v509, 2
    %v511 = vmax.f32 %v509, %v510
    %v512 = vrot.slane %v511, 1
    %v513 = vmax.f32 %v511, %v512
    %v514 = vsel %vm299, %v357, -inf
    %v515 = vrot.slane %v514, 4
    %v516 = vmax.f32 %v514, %v515
    %v517 = vrot.slane %v516, 2
    %v518 = vmax.f32 %v516, %v517
    %v519 = vrot.slane %v518, 1
    %v520 = vmax.f32 %v518, %v519
    %v521 = vsel %vm299, %v360, -inf
    %v522 = vrot.slane %v521, 4
    %v523 = vmax.f32 %v521, %v522
    %v524 = vrot.slane %v523, 2
    %v525 = vmax.f32 %v523, %v524
    %v526 = vrot.slane %v525, 1
    %v527 = vmax.f32 %v525, %v526
    %v528 = vsel %vm299, %v363, -inf
    %v529 = vrot.slane %v528, 4
    %v530 = vmax.f32 %v528, %v529
    %v531 = vrot.slane %v530, 2
    %v532 = vmax.f32 %v530, %v531
    %v533 = vrot.slane %v532, 1
    %v534 = vmax.f32 %v532, %v533
    %v535 = vsub.f32 %v342, %v485
    %v536 = vsub.f32 %v345, %v492
    %v537 = vsub.f32 %v348, %v499
    %v538 = vsub.f32 %v351, %v506
    %v539 = vsub.f32 %v354, %v513
    %v540 = vsub.f32 %v357, %v520
    %v541 = vsub.f32 %v360, %v527
    %v542 = vsub.f32 %v363, %v534
    %v543 = vmul.f32 %v535, 1.442695
    %v544 = vpow.pop %v543
    %v545 = vmul.f32 %v536, 1.442695
    %v546 = vpow.pop %v545
    %v547 = vmul.f32 %v537, 1.442695
    %v548 = vpow.pop %v547
    %v549 = vmul.f32 %v538, 1.442695
    %v550 = vpow.pop %v549
    %v551 = vmul.f32 %v539, 1.442695
    %v552 = vpow.pop %v551
    %v553 = vmul.f32 %v540, 1.442695
    %v554 = vpow.pop %v553
    %v555 = vmul.f32 %v541, 1.442695
    %v556 = vpow.pop %v555
    %v557 = vmul.f32 %v542, 1.442695
    %v558 = vpow.pop %v557
    %v559 = vsel %vm299, %v544, 0.0
    %v560 = vrot.slane %v559, 4
    %v561 = vadd.f32 %v559, %v560
    %v562 = vrot.slane %v561, 2
    %v563 = vadd.f32 %v561, %v562
    %v564 = vrot.slane %v563, 1
    %v565 = vadd.f32 %v563, %v564
    %v566 = vsel %vm299, %v546, 0.0
    %v567 = vrot.slane %v566, 4
    %v568 = vadd.f32 %v566, %v567
    %v569 = vrot.slane %v568, 2
    %v570 = vadd.f32 %v568, %v569
    %v571 = vrot.slane %v570, 1
    %v572 = vadd.f32 %v570, %v571
    %v573 = vsel %vm299, %v548, 0.0
    %v574 = vrot.slane %v573, 4
    %v575 = vadd.f32 %v573, %v574
    %v576 = vrot.slane %v575, 2
    %v577 = vadd.f32 %v575, %v576
    %v578 = vrot.slane %v577, 1
    %v579 = vadd.f32 %v577, %v578
    %v580 = vsel %vm299, %v550, 0.0
    %v581 = vrot.slane %v580, 4
    %v582 = vadd.f32 %v580, %v581
    %v583 = vrot.slane %v582, 2
    %v584 = vadd.f32 %v582, %v583
    %v585 = vrot.slane %v584, 1
    %v586 = vadd.f32 %v584, %v585
    %v587 = vsel %vm299, %v552, 0.0
    %v588 = vrot.slane %v587, 4
    %v589 = vadd.f32 %v587, %v588
    %v590 = vrot.slane %v589, 2
    %v591 = vadd.f32 %v589, %v590
    %v592 = vrot.slane %v591, 1
    %v593 = vadd.f32 %v591, %v592
    %v594 = vsel %vm299, %v554, 0.0
    %v595 = vrot.slane %v594, 4
    %v596 = vadd.f32 %v594, %v595
    %v597 = vrot.slane %v596, 2
    %v598 = vadd.f32 %v596, %v597
    %v599 = vrot.slane %v598, 1
    %v600 = vadd.f32 %v598, %v599
    %v601 = vsel %vm299, %v556, 0.0
    %v602 = vrot.slane %v601, 4
    %v603 = vadd.f32 %v601, %v602
    %v604 = vrot.slane %v603, 2
    %v605 = vadd.f32 %v603, %v604
    %v606 = vrot.slane %v605, 1
    %v607 = vadd.f32 %v605, %v606
    %v608 = vsel %vm299, %v558, 0.0
    %v609 = vrot.slane %v608, 4
    %v610 = vadd.f32 %v608, %v609
    %v611 = vrot.slane %v610, 2
    %v612 = vadd.f32 %v610, %v611
    %v613 = vrot.slane %v612, 1
    %v614 = vadd.f32 %v612, %v613
    %v615 = vrcp.pop %v565
    %v616 = vmul.f32 %v565, %v615
    %v617 = vsub.f32 1.0, %v616
    %v618 = vmul.f32 %v615, %v617
    %v619 = vadd.f32 %v615, %v618
    %vm620 = vweird.f32 %v565
    %vm621 = vweird.f32 %v615
    %vm622 = vmor %vm620, %vm621
    %v623 = vsel %vm622, %v615, %v619
    %v624 = vand.u32 2147483647, %v565
    %vm625 = vcmp.eq.f32.partialorder %v624, 8.507059e+37
    %v626 = vand.u32 %v565, 2147483648
    %v627 = vor.u32 1.1754944e-38, %v626
    %v628 = vsel %vm625, %v627, %v623
    %v629 = vrcp.pop %v572
    %v630 = vmul.f32 %v572, %v629
    %v631 = vsub.f32 1.0, %v630
    %v632 = vmul.f32 %v629, %v631
    %v633 = vadd.f32 %v629, %v632
    %vm634 = vweird.f32 %v572
    %vm635 = vweird.f32 %v629
    %vm636 = vmor %vm634, %vm635
    %v637 = vsel %vm636, %v629, %v633
    %v638 = vand.u32 2147483647, %v572
    %vm639 = vcmp.eq.f32.partialorder %v638, 8.507059e+37
    %v640 = vand.u32 %v572, 2147483648
    %v641 = vor.u32 1.1754944e-38, %v640
    %v642 = vsel %vm639, %v641, %v637
    %v643 = vrcp.pop %v579
    %v644 = vmul.f32 %v579, %v643
    %v645 = vsub.f32 1.0, %v644
    %v646 = vmul.f32 %v643, %v645
    %v647 = vadd.f32 %v643, %v646
    %vm648 = vweird.f32 %v579
    %vm649 = vweird.f32 %v643
    %vm650 = vmor %vm648, %vm649
    %v651 = vsel %vm650, %v643, %v647
    %v652 = vand.u32 2147483647, %v579
    %vm653 = vcmp.eq.f32.partialorder %v652, 8.507059e+37
    %v654 = vand.u32 %v579, 2147483648
    %v655 = vor.u32 1.1754944e-38, %v654
    %v656 = vsel %vm653, %v655, %v651
    %v657 = vrcp.pop %v586
    %v658 = vmul.f32 %v586, %v657
    %v659 = vsub.f32 1.0, %v658
    %v660 = vmul.f32 %v657, %v659
    %v661 = vadd.f32 %v657, %v660
    %vm662 = vweird.f32 %v586
    %vm663 = vweird.f32 %v657
    %vm664 = vmor %vm662, %vm663
    %v665 = vsel %vm664, %v657, %v661
    %v666 = vand.u32 2147483647, %v586
    %vm667 = vcmp.eq.f32.partialorder %v666, 8.507059e+37
    %v668 = vand.u32 %v586, 2147483648
    %v669 = vor.u32 1.1754944e-38, %v668
    %v670 = vsel %vm667, %v669, %v665
    %v671 = vrcp.pop %v593
    %v672 = vmul.f32 %v593, %v671
    %v673 = vsub.f32 1.0, %v672
    %v674 = vmul.f32 %v671, %v673
    %v675 = vadd.f32 %v671, %v674
    %vm676 = vweird.f32 %v593
    %vm677 = vweird.f32 %v671
    %vm678 = vmor %vm676, %vm677
    %v679 = vsel %vm678, %v671, %v675
    %v680 = vand.u32 2147483647, %v593
    %vm681 = vcmp.eq.f32.partialorder %v680, 8.507059e+37
    %v682 = vand.u32 %v593, 2147483648
    %v683 = vor.u32 1.1754944e-38, %v682
    %v684 = vsel %vm681, %v683, %v679
    %v685 = vrcp.pop %v600
    %v686 = vmul.f32 %v600, %v685
    %v687 = vsub.f32 1.0, %v686
    %v688 = vmul.f32 %v685, %v687
    %v689 = vadd.f32 %v685, %v688
    %vm690 = vweird.f32 %v600
    %vm691 = vweird.f32 %v685
    %vm692 = vmor %vm690, %vm691
    %v693 = vsel %vm692, %v685, %v689
    %v694 = vand.u32 2147483647, %v600
    %vm695 = vcmp.eq.f32.partialorder %v694, 8.507059e+37
    %v696 = vand.u32 %v600, 2147483648
    %v697 = vor.u32 1.1754944e-38, %v696
    %v698 = vsel %vm695, %v697, %v693
    %v699 = vrcp.pop %v607
    %v700 = vmul.f32 %v607, %v699
    %v701 = vsub.f32 1.0, %v700
    %v702 = vmul.f32 %v699, %v701
    %v703 = vadd.f32 %v699, %v702
    %vm704 = vweird.f32 %v607
    %vm705 = vweird.f32 %v699
    %vm706 = vmor %vm704, %vm705
    %v707 = vsel %vm706, %v699, %v703
    %v708 = vand.u32 2147483647, %v607
    %vm709 = vcmp.eq.f32.partialorder %v708, 8.507059e+37
    %v710 = vand.u32 %v607, 2147483648
    %v711 = vor.u32 1.1754944e-38, %v710
    %v712 = vsel %vm709, %v711, %v707
    %v713 = vrcp.pop %v614
    %v714 = vmul.f32 %v614, %v713
    %v715 = vsub.f32 1.0, %v714
    %v716 = vmul.f32 %v713, %v715
    %v717 = vadd.f32 %v713, %v716
    %vm718 = vweird.f32 %v614
    %vm719 = vweird.f32 %v713
    %vm720 = vmor %vm718, %vm719
    %v721 = vsel %vm720, %v713, %v717
    %v722 = vand.u32 2147483647, %v614
    %vm723 = vcmp.eq.f32.partialorder %v722, 8.507059e+37
    %v724 = vand.u32 %v614, 2147483648
    %v725 = vor.u32 1.1754944e-38, %v724
    %v726 = vsel %vm723, %v725, %v721
    %v727 = vmul.f32 %v544, %v628
    %v728 = vmul.f32 %v546, %v642
    %v729 = vmul.f32 %v548, %v656
    %v730 = vmul.f32 %v550, %v670
    %v731 = vmul.f32 %v552, %v684
    %v732 = vmul.f32 %v554, %v698
    %v733 = vmul.f32 %v556, %v712
    %v734 = vmul.f32 %v558, %v726
    %v735 = vsel %vm299, %v432, -inf
    %v736 = vsel %vm299, %v435, -inf
    %v737 = vmax.f32 %v735, %v736
    %v738 = vrot.slane %v737, 4
    %v739 = vmax.f32 %v737, %v738
    %v740 = vrot.slane %v739, 2
    %v741 = vmax.f32 %v739, %v740
    %v742 = vrot.slane %v741, 1
    %v743 = vmax.f32 %v741, %v742
    %v744 = vsel %vm299, %v438, -inf
    %v745 = vsel %vm299, %v441, -inf
    %v746 = vmax.f32 %v744, %v745
    %v747 = vrot.slane %v746, 4
    %v748 = vmax.f32 %v746, %v747
    %v749 = vrot.slane %v748, 2
    %v750 = vmax.f32 %v748, %v749
    %v751 = vrot.slane %v750, 1
    %v752 = vmax.f32 %v750, %v751
    %v753 = vsel %vm299, %v444, -inf
    %v754 = vsel %vm299, %v447, -inf
    %v755 = vmax.f32 %v753, %v754
    %v756 = vrot.slane %v755, 4
    %v757 = vmax.f32 %v755, %v756
    %v758 = vrot.slane %v757, 2
    %v759 = vmax.f32 %v757, %v758
    %v760 = vrot.slane %v759, 1
    %v761 = vmax.f32 %v759, %v760
    %v762 = vsel %vm299, %v450, -inf
    %v763 = vsel %vm299, %v453, -inf
    %v764 = vmax.f32 %v762, %v763
    %v765 = vrot.slane %v764, 4
    %v766 = vmax.f32 %v764, %v765
    %v767 = vrot.slane %v766, 2
    %v768 = vmax.f32 %v766, %v767
    %v769 = vrot.slane %v768, 1
    %v770 = vmax.f32 %v768, %v769
    %v771 = vsel %vm299, %v456, -inf
    %v772 = vsel %vm299, %v459, -inf
    %v773 = vmax.f32 %v771, %v772
    %v774 = vrot.slane %v773, 4
    %v775 = vmax.f32 %v773, %v774
    %v776 = vrot.slane %v775, 2
    %v777 = vmax.f32 %v775, %v776
    %v778 = vrot.slane %v777, 1
    %v779 = vmax.f32 %v777, %v778
    %v780 = vsel %vm299, %v462, -inf
    %v781 = vsel %vm299, %v465, -inf
    %v782 = vmax.f32 %v780, %v781
    %v783 = vrot.slane %v782, 4
    %v784 = vmax.f32 %v782, %v783
    %v785 = vrot.slane %v784, 2
    %v786 = vmax.f32 %v784, %v785
    %v787 = vrot.slane %v786, 1
    %v788 = vmax.f32 %v786, %v787
    %v789 = vsel %vm299, %v468, -inf
    %v790 = vsel %vm299, %v471, -inf
    %v791 = vmax.f32 %v789, %v790
    %v792 = vrot.slane %v791, 4
    %v793 = vmax.f32 %v791, %v792
    %v794 = vrot.slane %v793, 2
    %v795 = vmax.f32 %v793, %v794
    %v796 = vrot.slane %v795, 1
    %v797 = vmax.f32 %v795, %v796
    %v798 = vsel %vm299, %v474, -inf
    %v799 = vsel %vm299, %v477, -inf
    %v800 = vmax.f32 %v798, %v799
    %v801 = vrot.slane %v800, 4
    %v802 = vmax.f32 %v800, %v801
    %v803 = vrot.slane %v802, 2
    %v804 = vmax.f32 %v802, %v803
    %v805 = vrot.slane %v804, 1
    %v806 = vmax.f32 %v804, %v805
    %v807 = vsub.f32 %v432, %v743
    %v808 = vsub.f32 %v435, %v743
    %v809 = vsub.f32 %v438, %v752
    %v810 = vsub.f32 %v441, %v752
    %v811 = vsub.f32 %v444, %v761
    %v812 = vsub.f32 %v447, %v761
    %v813 = vsub.f32 %v450, %v770
    %v814 = vsub.f32 %v453, %v770
    %v815 = vsub.f32 %v456, %v779
    %v816 = vsub.f32 %v459, %v779
    %v817 = vsub.f32 %v462, %v788
    %v818 = vsub.f32 %v465, %v788
    %v819 = vsub.f32 %v468, %v797
    %v820 = vsub.f32 %v471, %v797
    %v821 = vsub.f32 %v474, %v806
    %v822 = vsub.f32 %v477, %v806
    %v823 = vmul.f32 %v807, 1.442695
    %v824 = vpow.pop %v823
    %v825 = vmul.f32 %v808, 1.442695
    %v826 = vpow.pop %v825
    %v827 = vmul.f32 %v809, 1.442695
    %v828 = vpow.pop %v827
    %v829 = vmul.f32 %v810, 1.442695
    %v830 = vpow.pop %v829
    %v831 = vmul.f32 %v811, 1.442695
    %v832 = vpow.pop %v831
    %v833 = vmul.f32 %v812, 1.442695
    %v834 = vpow.pop %v833
    %v835 = vmul.f32 %v813, 1.442695
    %v836 = vpow.pop %v835
    %v837 = vmul.f32 %v814, 1.442695
    %v838 = vpow.pop %v837
    %v839 = vmul.f32 %v815, 1.442695
    %v840 = vpow.pop %v839
    %v841 = vmul.f32 %v816, 1.442695
    %v842 = vpow.pop %v841
    %v843 = vmul.f32 %v817, 1.442695
    %v844 = vpow.pop %v843
    %v845 = vmul.f32 %v818, 1.442695
    %v846 = vpow.pop %v845
    %v847 = vmul.f32 %v819, 1.442695
    %v848 = vpow.pop %v847
    %v849 = vmul.f32 %v820, 1.442695
    %v850 = vpow.pop %v849
    %v851 = vmul.f32 %v821, 1.442695
    %v852 = vpow.pop %v851
    %v853 = vmul.f32 %v822, 1.442695
    %v854 = vpow.pop %v853
    %v855 = vsel %vm299, %v824, 0.0
    %v856 = vsel %vm299, %v826, 0.0
    %v857 = vadd.f32 %v855, %v856
    %v858 = vrot.slane %v857, 4
    %v859 = vadd.f32 %v857, %v858
    %v860 = vrot.slane %v859, 2
    %v861 = vadd.f32 %v859, %v860
    %v862 = vrot.slane %v861, 1
    %v863 = vadd.f32 %v861, %v862
    %v864 = vsel %vm299, %v828, 0.0
    %v865 = vsel %vm299, %v830, 0.0
    %v866 = vadd.f32 %v864, %v865
    %v867 = vrot.slane %v866, 4
    %v868 = vadd.f32 %v866, %v867
    %v869 = vrot.slane %v868, 2
    %v870 = vadd.f32 %v868, %v869
    %v871 = vrot.slane %v870, 1
    %v872 = vadd.f32 %v870, %v871
    %v873 = vsel %vm299, %v832, 0.0
    %v874 = vsel %vm299, %v834, 0.0
    %v875 = vadd.f32 %v873, %v874
    %v876 = vrot.slane %v875, 4
    %v877 = vadd.f32 %v875, %v876
    %v878 = vrot.slane %v877, 2
    %v879 = vadd.f32 %v877, %v878
    %v880 = vrot.slane %v879, 1
    %v881 = vadd.f32 %v879, %v880
    %v882 = vsel %vm299, %v836, 0.0
    %v883 = vsel %vm299, %v838, 0.0
    %v884 = vadd.f32 %v882, %v883
    %v885 = vrot.slane %v884, 4
    %v886 = vadd.f32 %v884, %v885
    %v887 = vrot.slane %v886, 2
    %v888 = vadd.f32 %v886, %v887
    %v889 = vrot.slane %v888, 1
    %v890 = vadd.f32 %v888, %v889
    %v891 = vsel %vm299, %v840, 0.0
    %v892 = vsel %vm299, %v842, 0.0
    %v893 = vadd.f32 %v891, %v892
    %v894 = vrot.slane %v893, 4
    %v895 = vadd.f32 %v893, %v894
    %v896 = vrot.slane %v895, 2
    %v897 = vadd.f32 %v895, %v896
    %v898 = vrot.slane %v897, 1
    %v899 = vadd.f32 %v897, %v898
    %v900 = vsel %vm299, %v844, 0.0
    %v901 = vsel %vm299, %v846, 0.0
    %v902 = vadd.f32 %v900, %v901
    %v903 = vrot.slane %v902, 4
    %v904 = vadd.f32 %v902, %v903
    %v905 = vrot.slane %v904, 2
    %v906 = vadd.f32 %v904, %v905
    %v907 = vrot.slane %v906, 1
    %v908 = vadd.f32 %v906, %v907
    %v909 = vsel %vm299, %v848, 0.0
    %v910 = vsel %vm299, %v850, 0.0
    %v911 = vadd.f32 %v909, %v910
    %v912 = vrot.slane %v911, 4
    %v913 = vadd.f32 %v911, %v912
    %v914 = vrot.slane %v913, 2
    %v915 = vadd.f32 %v913, %v914
    %v916 = vrot.slane %v915, 1
    %v917 = vadd.f32 %v915, %v916
    %v918 = vsel %vm299, %v852, 0.0
    %v919 = vsel %vm299, %v854, 0.0
    %v920 = vadd.f32 %v918, %v919
    %v921 = vrot.slane %v920, 4
    %v922 = vadd.f32 %v920, %v921
    %v923 = vrot.slane %v922, 2
    %v924 = vadd.f32 %v922, %v923
    %v925 = vrot.slane %v924, 1
    %v926 = vadd.f32 %v924, %v925
    %v927 = vrcp.pop %v863
    %v928 = vmul.f32 %v863, %v927
    %v929 = vsub.f32 1.0, %v928
    %v930 = vmul.f32 %v927, %v929
    %v931 = vadd.f32 %v927, %v930
    %vm932 = vweird.f32 %v863
    %vm933 = vweird.f32 %v927
    %vm934 = vmor %vm932, %vm933
    %v935 = vsel %vm934, %v927, %v931
    %v936 = vand.u32 2147483647, %v863
    %vm937 = vcmp.eq.f32.partialorder %v936, 8.507059e+37
    %v938 = vand.u32 %v863, 2147483648
    %v939 = vor.u32 1.1754944e-38, %v938
    %v940 = vsel %vm937, %v939, %v935
    %v941 = vrcp.pop %v872
    %v942 = vmul.f32 %v872, %v941
    %v943 = vsub.f32 1.0, %v942
    %v944 = vmul.f32 %v941, %v943
    %v945 = vadd.f32 %v941, %v944
    %vm946 = vweird.f32 %v872
    %vm947 = vweird.f32 %v941
    %vm948 = vmor %vm946, %vm947
    %v949 = vsel %vm948, %v941, %v945
    %v950 = vand.u32 2147483647, %v872
    %vm951 = vcmp.eq.f32.partialorder %v950, 8.507059e+37
    %v952 = vand.u32 %v872, 2147483648
    %v953 = vor.u32 1.1754944e-38, %v952
    %v954 = vsel %vm951, %v953, %v949
    %v955 = vrcp.pop %v881
    %v956 = vmul.f32 %v881, %v955
    %v957 = vsub.f32 1.0, %v956
    %v958 = vmul.f32 %v955, %v957
    %v959 = vadd.f32 %v955, %v958
    %vm960 = vweird.f32 %v881
    %vm961 = vweird.f32 %v955
    %vm962 = vmor %vm960, %vm961
    %v963 = vsel %vm962, %v955, %v959
    %v964 = vand.u32 2147483647, %v881
    %vm965 = vcmp.eq.f32.partialorder %v964, 8.507059e+37
    %v966 = vand.u32 %v881, 2147483648
    %v967 = vor.u32 1.1754944e-38, %v966
    %v968 = vsel %vm965, %v967, %v963
    %v969 = vrcp.pop %v890
    %v970 = vmul.f32 %v890, %v969
    %v971 = vsub.f32 1.0, %v970
    %v972 = vmul.f32 %v969, %v971
    %v973 = vadd.f32 %v969, %v972
    %vm974 = vweird.f32 %v890
    %vm975 = vweird.f32 %v969
    %vm976 = vmor %vm974, %vm975
    %v977 = vsel %vm976, %v969, %v973
    %v978 = vand.u32 2147483647, %v890
    %vm979 = vcmp.eq.f32.partialorder %v978, 8.507059e+37
    %v980 = vand.u32 %v890, 2147483648
    %v981 = vor.u32 1.1754944e-38, %v980
    %v982 = vsel %vm979, %v981, %v977
    %v983 = vrcp.pop %v899
    %v984 = vmul.f32 %v899, %v983
    %v985 = vsub.f32 1.0, %v984
    %v986 = vmul.f32 %v983, %v985
    %v987 = vadd.f32 %v983, %v986
    %vm988 = vweird.f32 %v899
    %vm989 = vweird.f32 %v983
    %vm990 = vmor %vm988, %vm989
    %v991 = vsel %vm990, %v983, %v987
    %v992 = vand.u32 2147483647, %v899
    %vm993 = vcmp.eq.f32.partialorder %v992, 8.507059e+37
    %v994 = vand.u32 %v899, 2147483648
    %v995 = vor.u32 1.1754944e-38, %v994
    %v996 = vsel %vm993, %v995, %v991
    %v997 = vrcp.pop %v908
    %v998 = vmul.f32 %v908, %v997
    %v999 = vsub.f32 1.0, %v998
    %v1000 = vmul.f32 %v997, %v999
    %v1001 = vadd.f32 %v997, %v1000
    %vm1002 = vweird.f32 %v908
    %vm1003 = vweird.f32 %v997
    %vm1004 = vmor %vm1002, %vm1003
    %v1005 = vsel %vm1004, %v997, %v1001
    %v1006 = vand.u32 2147483647, %v908
    %vm1007 = vcmp.eq.f32.partialorder %v1006, 8.507059e+37
    %v1008 = vand.u32 %v908, 2147483648
    %v1009 = vor.u32 1.1754944e-38, %v1008
    %v1010 = vsel %vm1007, %v1009, %v1005
    %v1011 = vrcp.pop %v917
    %v1012 = vmul.f32 %v917, %v1011
    %v1013 = vsub.f32 1.0, %v1012
    %v1014 = vmul.f32 %v1011, %v1013
    %v1015 = vadd.f32 %v1011, %v1014
    %vm1016 = vweird.f32 %v917
    %vm1017 = vweird.f32 %v1011
    %vm1018 = vmor %vm1016, %vm1017
    %v1019 = vsel %vm1018, %v1011, %v1015
    %v1020 = vand.u32 2147483647, %v917
    %vm1021 = vcmp.eq.f32.partialorder %v1020, 8.507059e+37
    %v1022 = vand.u32 %v917, 2147483648
    %v1023 = vor.u32 1.1754944e-38, %v1022
    %v1024 = vsel %vm1021, %v1023, %v1019
    %v1025 = vrcp.pop %v926
    %v1026 = vmul.f32 %v926, %v1025
    %v1027 = vsub.f32 1.0, %v1026
    %v1028 = vmul.f32 %v1025, %v1027
    %v1029 = vadd.f32 %v1025, %v1028
    %vm1030 = vweird.f32 %v926
    %vm1031 = vweird.f32 %v1025
    %vm1032 = vmor %vm1030, %vm1031
    %v1033 = vsel %vm1032, %v1025, %v1029
    %v1034 = vand.u32 2147483647, %v926
    %vm1035 = vcmp.eq.f32.partialorder %v1034, 8.507059e+37
    %v1036 = vand.u32 %v926, 2147483648
    %v1037 = vor.u32 1.1754944e-38, %v1036
    %v1038 = vsel %vm1035, %v1037, %v1033
    %v1039 = vmul.f32 %v824, %v940
    %v1040 = vmul.f32 %v826, %v940
    %v1041 = vmul.f32 %v828, %v954
    %v1042 = vmul.f32 %v830, %v954
    %v1043 = vmul.f32 %v832, %v968
    %v1044 = vmul.f32 %v834, %v968
    %v1045 = vmul.f32 %v836, %v982
    %v1046 = vmul.f32 %v838, %v982
    %v1047 = vmul.f32 %v840, %v996
    %v1048 = vmul.f32 %v842, %v996
    %v1049 = vmul.f32 %v844, %v1010
    %v1050 = vmul.f32 %v846, %v1010
    %v1051 = vmul.f32 %v848, %v1024
    %v1052 = vmul.f32 %v850, %v1024
    %v1053 = vmul.f32 %v852, %v1038
    %v1054 = vmul.f32 %v854, %v1038
    %1055 = vxpose.xlu0.b32.start [1/16] %v49, 128
    %1056 = vxpose.xlu0.b32.cont [2/16] 0.0, 128
    %1057 = vxpose.xlu0.b32.cont [3/16] 0.0, 128
    %1058 = vxpose.xlu0.b32.cont [4/16] 0.0, 128
    %1059 = vxpose.xlu0.b32.cont [5/16] 0.0, 128
    %1060 = vxpose.xlu0.b32.cont [6/16] 0.0, 128
    %1061 = vxpose.xlu0.b32.cont [7/16] 0.0, 128
    %1062 = vxpose.xlu0.b32.cont [8/16] 0.0, 128
    %1063 = vxpose.xlu0.b32.cont [9/16] 0.0, 128
    %1064 = vxpose.xlu0.b32.cont [10/16] 0.0, 128
    %1065 = vxpose.xlu0.b32.cont [11/16] 0.0, 128
    %1066 = vxpose.xlu0.b32.cont [12/16] 0.0, 128
    %1067 = vxpose.xlu0.b32.cont [13/16] 0.0, 128
    %1068 = vxpose.xlu0.b32.cont [14/16] 0.0, 128
    %1069 = vxpose.xlu0.b32.cont [15/16] 0.0, 128
    %1070 = vxpose.xlu0.b32.end [16/16] 0.0, 128
    %v1071 = vpop.trf.xlu0
    %v1072 = vpop.trf.xlu0
    %v1073 = vpop.trf.xlu0
    %v1074 = vpop.trf.xlu0
    %v1075 = vpop.trf.xlu0
    %v1076 = vpop.trf.xlu0
    %v1077 = vpop.trf.xlu0
    %v1078 = vpop.trf.xlu0
    %v1079 = vpop.trf.xlu0
    %v1080 = vpop.trf.xlu0
    %v1081 = vpop.trf.xlu0
    %v1082 = vpop.trf.xlu0
    %v1083 = vpop.trf.xlu0
    %v1084 = vpop.trf.xlu0
    %v1085 = vpop.trf.xlu0
    %v1086 = vpop.trf.xlu0
    %vm1087 = vcmask 64512
    %v1089 = vsel %vm1087, %v1071, 0
    %v1092 = vsel %vm1087, %v1072, 0
    %1094 = vmatpush.msra.mxu0 0.0
    %1095 = vmatpush.msra.mxu0 0.0
    %1096 = vmatpush.msra.mxu0 0.0
    %1097 = vmatpush.msra.mxu0 0.0
    %1098 = vmatpush.msra.mxu0 0.0
    %1099 = vmatpush.msra.mxu0 0.0
    %1100 = vmatpush.msra.mxu0 0.0
    %1101 = vmatpush.msra.mxu0 0.0
    %1102 = vmatpush.msra.mxu0 0.0
    %1103 = vmatpush.msra.mxu0 0.0
    %1104 = vmatpush.msra.mxu0 0.0
    %1105 = vmatpush.msra.mxu0 0.0
    %1106 = vmatpush.msra.mxu0 0.0
    %1107 = vmatpush.msra.mxu0 0.0
    %1108 = vmatpush.msra.mxu0 0.0
    %1109 = vmatpush.msra.mxu0 %v727
    %1110 = vmatmul.f32.gmra.mxu0 %v1089
    %v1111 = vpop.f32.mrf.mxu0
    %v1112 = vadd.f32 0.0, %v1111
    %1113 = vmatmul.f32.gmra.mxu0 %v1092
    %v1114 = vpop.f32.mrf.mxu0
    %v1115 = vadd.f32 0.0, %v1114
    %1116 = vdwg.mxu0
    %1117 = vxpose.xlu0.b32.start [1/16] %v57, 128
    %1118 = vxpose.xlu0.b32.cont [2/16] %v58, 128
    %1119 = vxpose.xlu0.b32.cont [3/16] 0.0, 128
    %1120 = vxpose.xlu0.b32.cont [4/16] 0.0, 128
    %1121 = vxpose.xlu0.b32.cont [5/16] 0.0, 128
    %1122 = vxpose.xlu0.b32.cont [6/16] 0.0, 128
    %1123 = vxpose.xlu0.b32.cont [7/16] 0.0, 128
    %1124 = vxpose.xlu0.b32.cont [8/16] 0.0, 128
    %1125 = vxpose.xlu0.b32.cont [9/16] 0.0, 128
    %1126 = vxpose.xlu0.b32.cont [10/16] 0.0, 128
    %1127 = vxpose.xlu0.b32.cont [11/16] 0.0, 128
    %1128 = vxpose.xlu0.b32.cont [12/16] 0.0, 128
    %1129 = vxpose.xlu0.b32.cont [13/16] 0.0, 128
    %1130 = vxpose.xlu0.b32.cont [14/16] 0.0, 128
    %1131 = vxpose.xlu0.b32.cont [15/16] 0.0, 128
    %1132 = vxpose.xlu0.b32.end [16/16] 0.0, 128
    %v1133 = vpop.trf.xlu0
    %v1134 = vpop.trf.xlu0
    %v1135 = vpop.trf.xlu0
    %v1136 = vpop.trf.xlu0
    %v1137 = vpop.trf.xlu0
    %v1138 = vpop.trf.xlu0
    %v1139 = vpop.trf.xlu0
    %v1140 = vpop.trf.xlu0
    %v1141 = vpop.trf.xlu0
    %v1142 = vpop.trf.xlu0
    %v1143 = vpop.trf.xlu0
    %v1144 = vpop.trf.xlu0
    %v1145 = vpop.trf.xlu0
    %v1146 = vpop.trf.xlu0
    %v1147 = vpop.trf.xlu0
    %v1148 = vpop.trf.xlu0
    %v1150 = vsel %vm91, %v1133, 0
    %v1153 = vsel %vm91, %v1134, 0
    %v1156 = vsel %vm91, %v1135, 0
    %1158 = vmatpush.msra.mxu0 0.0
    %1159 = vmatpush.msra.mxu0 0.0
    %1160 = vmatpush.msra.mxu0 0.0
    %1161 = vmatpush.msra.mxu0 0.0
    %1162 = vmatpush.msra.mxu0 0.0
    %1163 = vmatpush.msra.mxu0 0.0
    %1164 = vmatpush.msra.mxu0 0.0
    %1165 = vmatpush.msra.mxu0 0.0
    %1166 = vmatpush.msra.mxu0 0.0
    %1167 = vmatpush.msra.mxu0 0.0
    %1168 = vmatpush.msra.mxu0 0.0
    %1169 = vmatpush.msra.mxu0 0.0
    %1170 = vmatpush.msra.mxu0 0.0
    %1171 = vmatpush.msra.mxu0 0.0
    %1172 = vmatpush.msra.mxu0 %v1040
    %1173 = vmatpush.msra.mxu0 %v1039
    %1174 = vmatmul.f32.gmra.mxu0 %v1150
    %v1175 = vpop.f32.mrf.mxu0
    %v1176 = vadd.f32 0.0, %v1175
    %1177 = vmatmul.f32.gmra.mxu0 %v1153
    %v1178 = vpop.f32.mrf.mxu0
    %v1179 = vadd.f32 0.0, %v1178
    %1180 = vmatmul.f32.gmra.mxu0 %v1156
    %v1181 = vpop.f32.mrf.mxu0
    %v1182 = vadd.f32 0.0, %v1181
    %1183 = vdwg.mxu0
    %1184 = vxpose.xlu0.b32.start [1/16] %v50, 128
    %1185 = vxpose.xlu0.b32.cont [2/16] 0.0, 128
    %1186 = vxpose.xlu0.b32.cont [3/16] 0.0, 128
    %1187 = vxpose.xlu0.b32.cont [4/16] 0.0, 128
    %1188 = vxpose.xlu0.b32.cont [5/16] 0.0, 128
    %1189 = vxpose.xlu0.b32.cont [6/16] 0.0, 128
    %1190 = vxpose.xlu0.b32.cont [7/16] 0.0, 128
    %1191 = vxpose.xlu0.b32.cont [8/16] 0.0, 128
    %1192 = vxpose.xlu0.b32.cont [9/16] 0.0, 128
    %1193 = vxpose.xlu0.b32.cont [10/16] 0.0, 128
    %1194 = vxpose.xlu0.b32.cont [11/16] 0.0, 128
    %1195 = vxpose.xlu0.b32.cont [12/16] 0.0, 128
    %1196 = vxpose.xlu0.b32.cont [13/16] 0.0, 128
    %1197 = vxpose.xlu0.b32.cont [14/16] 0.0, 128
    %1198 = vxpose.xlu0.b32.cont [15/16] 0.0, 128
    %1199 = vxpose.xlu0.b32.end [16/16] 0.0, 128
    %v1200 = vpop.trf.xlu0
    %v1201 = vpop.trf.xlu0
    %v1202 = vpop.trf.xlu0
    %v1203 = vpop.trf.xlu0
    %v1204 = vpop.trf.xlu0
    %v1205 = vpop.trf.xlu0
    %v1206 = vpop.trf.xlu0
    %v1207 = vpop.trf.xlu0
    %v1208 = vpop.trf.xlu0
    %v1209 = vpop.trf.xlu0
    %v1210 = vpop.trf.xlu0
    %v1211 = vpop.trf.xlu0
    %v1212 = vpop.trf.xlu0
    %v1213 = vpop.trf.xlu0
    %v1214 = vpop.trf.xlu0
    %v1215 = vpop.trf.xlu0
    %v1217 = vsel %vm1087, %v1200, 0
    %v1220 = vsel %vm1087, %v1201, 0
    %1222 = vmatpush.msra.mxu0 0.0
    %1223 = vmatpush.msra.mxu0 0.0
    %1224 = vmatpush.msra.mxu0 0.0
    %1225 = vmatpush.msra.mxu0 0.0
    %1226 = vmatpush.msra.mxu0 0.0
    %1227 = vmatpush.msra.mxu0 0.0
    %1228 = vmatpush.msra.mxu0 0.0
    %1229 = vmatpush.msra.mxu0 0.0
    %1230 = vmatpush.msra.mxu0 0.0
    %1231 = vmatpush.msra.mxu0 0.0
    %1232 = vmatpush.msra.mxu0 0.0
    %1233 = vmatpush.msra.mxu0 0.0
    %1234 = vmatpush.msra.mxu0 0.0
    %1235 = vmatpush.msra.mxu0 0.0
    %1236 = vmatpush.msra.mxu0 0.0
    %1237 = vmatpush.msra.mxu0 %v728
    %1238 = vmatmul.f32.gmra.mxu0 %v1217
    %v1239 = vpop.f32.mrf.mxu0
    %v1240 = vadd.f32 0.0, %v1239
    %1241 = vmatmul.f32.gmra.mxu0 %v1220
    %v1242 = vpop.f32.mrf.mxu0
    %v1243 = vadd.f32 0.0, %v1242
    %1244 = vdwg.mxu0
    %1245 = vxpose.xlu0.b32.start [1/16] %v59, 128
    %1246 = vxpose.xlu0.b32.cont [2/16] %v60, 128
    %1247 = vxpose.xlu0.b32.cont [3/16] 0.0, 128
    %1248 = vxpose.xlu0.b32.cont [4/16] 0.0, 128
    %1249 = vxpose.xlu0.b32.cont [5/16] 0.0, 128
    %1250 = vxpose.xlu0.b32.cont [6/16] 0.0, 128
    %1251 = vxpose.xlu0.b32.cont [7/16] 0.0, 128
    %1252 = vxpose.xlu0.b32.cont [8/16] 0.0, 128
    %1253 = vxpose.xlu0.b32.cont [9/16] 0.0, 128
    %1254 = vxpose.xlu0.b32.cont [10/16] 0.0, 128
    %1255 = vxpose.xlu0.b32.cont [11/16] 0.0, 128
    %1256 = vxpose.xlu0.b32.cont [12/16] 0.0, 128
    %1257 = vxpose.xlu0.b32.cont [13/16] 0.0, 128
    %1258 = vxpose.xlu0.b32.cont [14/16] 0.0, 128
    %1259 = vxpose.xlu0.b32.cont [15/16] 0.0, 128
    %1260 = vxpose.xlu0.b32.end [16/16] 0.0, 128
    %v1261 = vpop.trf.xlu0
    %v1262 = vpop.trf.xlu0
    %v1263 = vpop.trf.xlu0
    %v1264 = vpop.trf.xlu0
    %v1265 = vpop.trf.xlu0
    %v1266 = vpop.trf.xlu0
    %v1267 = vpop.trf.xlu0
    %v1268 = vpop.trf.xlu0
    %v1269 = vpop.trf.xlu0
    %v1270 = vpop.trf.xlu0
    %v1271 = vpop.trf.xlu0
    %v1272 = vpop.trf.xlu0
    %v1273 = vpop.trf.xlu0
    %v1274 = vpop.trf.xlu0
    %v1275 = vpop.trf.xlu0
    %v1276 = vpop.trf.xlu0
    %v1278 = vsel %vm91, %v1261, 0
    %v1281 = vsel %vm91, %v1262, 0
    %v1284 = vsel %vm91, %v1263, 0
    %1286 = vmatpush.msra.mxu0 0.0
    %1287 = vmatpush.msra.mxu0 0.0
    %1288 = vmatpush.msra.mxu0 0.0
    %1289 = vmatpush.msra.mxu0 0.0
    %1290 = vmatpush.msra.mxu0 0.0
    %1291 = vmatpush.msra.mxu0 0.0
    %1292 = vmatpush.msra.mxu0 0.0
    %1293 = vmatpush.msra.mxu0 0.0
    %1294 = vmatpush.msra.mxu0 0.0
    %1295 = vmatpush.msra.mxu0 0.0
    %1296 = vmatpush.msra.mxu0 0.0
    %1297 = vmatpush.msra.mxu0 0.0
    %1298 = vmatpush.msra.mxu0 0.0
    %1299 = vmatpush.msra.mxu0 0.0
    %1300 = vmatpush.msra.mxu0 %v1042
    %1301 = vmatpush.msra.mxu0 %v1041
    %1302 = vmatmul.f32.gmra.mxu0 %v1278
    %v1303 = vpop.f32.mrf.mxu0
    %v1304 = vadd.f32 0.0, %v1303
    %1305 = vmatmul.f32.gmra.mxu0 %v1281
    %v1306 = vpop.f32.mrf.mxu0
    %v1307 = vadd.f32 0.0, %v1306
    %1308 = vmatmul.f32.gmra.mxu0 %v1284
    %v1309 = vpop.f32.mrf.mxu0
    %v1310 = vadd.f32 0.0, %v1309
    %1311 = vdwg.mxu0
    %1312 = vxpose.xlu0.b32.start [1/16] %v51, 128
    %1313 = vxpose.xlu0.b32.cont [2/16] 0.0, 128
    %1314 = vxpose.xlu0.b32.cont [3/16] 0.0, 128
    %1315 = vxpose.xlu0.b32.cont [4/16] 0.0, 128
    %1316 = vxpose.xlu0.b32.cont [5/16] 0.0, 128
    %1317 = vxpose.xlu0.b32.cont [6/16] 0.0, 128
    %1318 = vxpose.xlu0.b32.cont [7/16] 0.0, 128
    %1319 = vxpose.xlu0.b32.cont [8/16] 0.0, 128
    %1320 = vxpose.xlu0.b32.cont [9/16] 0.0, 128
    %1321 = vxpose.xlu0.b32.cont [10/16] 0.0, 128
    %1322 = vxpose.xlu0.b32.cont [11/16] 0.0, 128
    %1323 = vxpose.xlu0.b32.cont [12/16] 0.0, 128
    %1324 = vxpose.xlu0.b32.cont [13/16] 0.0, 128
    %1325 = vxpose.xlu0.b32.cont [14/16] 0.0, 128
    %1326 = vxpose.xlu0.b32.cont [15/16] 0.0, 128
    %1327 = vxpose.xlu0.b32.end [16/16] 0.0, 128
    %v1328 = vpop.trf.xlu0
    %v1329 = vpop.trf.xlu0
    %v1330 = vpop.trf.xlu0
    %v1331 = vpop.trf.xlu0
    %v1332 = vpop.trf.xlu0
    %v1333 = vpop.trf.xlu0
    %v1334 = vpop.trf.xlu0
    %v1335 = vpop.trf.xlu0
    %v1336 = vpop.trf.xlu0
    %v1337 = vpop.trf.xlu0
    %v1338 = vpop.trf.xlu0
    %v1339 = vpop.trf.xlu0
    %v1340 = vpop.trf.xlu0
    %v1341 = vpop.trf.xlu0
    %v1342 = vpop.trf.xlu0
    %v1343 = vpop.trf.xlu0
    %v1345 = vsel %vm1087, %v1328, 0
    %v1348 = vsel %vm1087, %v1329, 0
    %1350 = vmatpush.msra.mxu0 0.0
    %1351 = vmatpush.msra.mxu0 0.0
    %1352 = vmatpush.msra.mxu0 0.0
    %1353 = vmatpush.msra.mxu0 0.0
    %1354 = vmatpush.msra.mxu0 0.0
    %1355 = vmatpush.msra.mxu0 0.0
    %1356 = vmatpush.msra.mxu0 0.0
    %1357 = vmatpush.msra.mxu0 0.0
    %1358 = vmatpush.msra.mxu0 0.0
    %1359 = vmatpush.msra.mxu0 0.0
    %1360 = vmatpush.msra.mxu0 0.0
    %1361 = vmatpush.msra.mxu0 0.0
    %1362 = vmatpush.msra.mxu0 0.0
    %1363 = vmatpush.msra.mxu0 0.0
    %1364 = vmatpush.msra.mxu0 0.0
    %1365 = vmatpush.msra.mxu0 %v729
    %1366 = vmatmul.f32.gmra.mxu0 %v1345
    %v1367 = vpop.f32.mrf.mxu0
    %v1368 = vadd.f32 0.0, %v1367
    %1369 = vmatmul.f32.gmra.mxu0 %v1348
    %v1370 = vpop.f32.mrf.mxu0
    %v1371 = vadd.f32 0.0, %v1370
    %1372 = vdwg.mxu0
    %1373 = vxpose.xlu0.b32.start [1/16] %v61, 128
    %1374 = vxpose.xlu0.b32.cont [2/16] %v62, 128
    %1375 = vxpose.xlu0.b32.cont [3/16] 0.0, 128
    %1376 = vxpose.xlu0.b32.cont [4/16] 0.0, 128
    %1377 = vxpose.xlu0.b32.cont [5/16] 0.0, 128
    %1378 = vxpose.xlu0.b32.cont [6/16] 0.0, 128
    %1379 = vxpose.xlu0.b32.cont [7/16] 0.0, 128
    %1380 = vxpose.xlu0.b32.cont [8/16] 0.0, 128
    %1381 = vxpose.xlu0.b32.cont [9/16] 0.0, 128
    %1382 = vxpose.xlu0.b32.cont [10/16] 0.0, 128
    %1383 = vxpose.xlu0.b32.cont [11/16] 0.0, 128
    %1384 = vxpose.xlu0.b32.cont [12/16] 0.0, 128
    %1385 = vxpose.xlu0.b32.cont [13/16] 0.0, 128
    %1386 = vxpose.xlu0.b32.cont [14/16] 0.0, 128
    %1387 = vxpose.xlu0.b32.cont [15/16] 0.0, 128
    %1388 = vxpose.xlu0.b32.end [16/16] 0.0, 128
    %v1389 = vpop.trf.xlu0
    %v1390 = vpop.trf.xlu0
    %v1391 = vpop.trf.xlu0
    %v1392 = vpop.trf.xlu0
    %v1393 = vpop.trf.xlu0
    %v1394 = vpop.trf.xlu0
    %v1395 = vpop.trf.xlu0
    %v1396 = vpop.trf.xlu0
    %v1397 = vpop.trf.xlu0
    %v1398 = vpop.trf.xlu0
    %v1399 = vpop.trf.xlu0
    %v1400 = vpop.trf.xlu0
    %v1401 = vpop.trf.xlu0
    %v1402 = vpop.trf.xlu0
    %v1403 = vpop.trf.xlu0
    %v1404 = vpop.trf.xlu0
    %v1406 = vsel %vm91, %v1389, 0
    %v1409 = vsel %vm91, %v1390, 0
    %v1412 = vsel %vm91, %v1391, 0
    %1414 = vmatpush.msra.mxu0 0.0
    %1415 = vmatpush.msra.mxu0 0.0
    %1416 = vmatpush.msra.mxu0 0.0
    %1417 = vmatpush.msra.mxu0 0.0
    %1418 = vmatpush.msra.mxu0 0.0
    %1419 = vmatpush.msra.mxu0 0.0
    %1420 = vmatpush.msra.mxu0 0.0
    %1421 = vmatpush.msra.mxu0 0.0
    %1422 = vmatpush.msra.mxu0 0.0
    %1423 = vmatpush.msra.mxu0 0.0
    %1424 = vmatpush.msra.mxu0 0.0
    %1425 = vmatpush.msra.mxu0 0.0
    %1426 = vmatpush.msra.mxu0 0.0
    %1427 = vmatpush.msra.mxu0 0.0
    %1428 = vmatpush.msra.mxu0 %v1044
    %1429 = vmatpush.msra.mxu0 %v1043
    %1430 = vmatmul.f32.gmra.mxu0 %v1406
    %v1431 = vpop.f32.mrf.mxu0
    %v1432 = vadd.f32 0.0, %v1431
    %1433 = vmatmul.f32.gmra.mxu0 %v1409
    %v1434 = vpop.f32.mrf.mxu0
    %v1435 = vadd.f32 0.0, %v1434
    %1436 = vmatmul.f32.gmra.mxu0 %v1412
    %v1437 = vpop.f32.mrf.mxu0
    %v1438 = vadd.f32 0.0, %v1437
    %1439 = vdwg.mxu0
    %1440 = vxpose.xlu0.b32.start [1/16] %v52, 128
    %1441 = vxpose.xlu0.b32.cont [2/16] 0.0, 128
    %1442 = vxpose.xlu0.b32.cont [3/16] 0.0, 128
    %1443 = vxpose.xlu0.b32.cont [4/16] 0.0, 128
    %1444 = vxpose.xlu0.b32.cont [5/16] 0.0, 128
    %1445 = vxpose.xlu0.b32.cont [6/16] 0.0, 128
    %1446 = vxpose.xlu0.b32.cont [7/16] 0.0, 128
    %1447 = vxpose.xlu0.b32.cont [8/16] 0.0, 128
    %1448 = vxpose.xlu0.b32.cont [9/16] 0.0, 128
    %1449 = vxpose.xlu0.b32.cont [10/16] 0.0, 128
    %1450 = vxpose.xlu0.b32.cont [11/16] 0.0, 128
    %1451 = vxpose.xlu0.b32.cont [12/16] 0.0, 128
    %1452 = vxpose.xlu0.b32.cont [13/16] 0.0, 128
    %1453 = vxpose.xlu0.b32.cont [14/16] 0.0, 128
    %1454 = vxpose.xlu0.b32.cont [15/16] 0.0, 128
    %1455 = vxpose.xlu0.b32.end [16/16] 0.0, 128
    %v1456 = vpop.trf.xlu0
    %v1457 = vpop.trf.xlu0
    %v1458 = vpop.trf.xlu0
    %v1459 = vpop.trf.xlu0
    %v1460 = vpop.trf.xlu0
    %v1461 = vpop.trf.xlu0
    %v1462 = vpop.trf.xlu0
    %v1463 = vpop.trf.xlu0
    %v1464 = vpop.trf.xlu0
    %v1465 = vpop.trf.xlu0
    %v1466 = vpop.trf.xlu0
    %v1467 = vpop.trf.xlu0
    %v1468 = vpop.trf.xlu0
    %v1469 = vpop.trf.xlu0
    %v1470 = vpop.trf.xlu0
    %v1471 = vpop.trf.xlu0
    %v1473 = vsel %vm1087, %v1456, 0
    %v1476 = vsel %vm1087, %v1457, 0
    %1478 = vmatpush.msra.mxu0 0.0
    %1479 = vmatpush.msra.mxu0 0.0
    %1480 = vmatpush.msra.mxu0 0.0
    %1481 = vmatpush.msra.mxu0 0.0
    %1482 = vmatpush.msra.mxu0 0.0
    %1483 = vmatpush.msra.mxu0 0.0
    %1484 = vmatpush.msra.mxu0 0.0
    %1485 = vmatpush.msra.mxu0 0.0
    %1486 = vmatpush.msra.mxu0 0.0
    %1487 = vmatpush.msra.mxu0 0.0
    %1488 = vmatpush.msra.mxu0 0.0
    %1489 = vmatpush.msra.mxu0 0.0
    %1490 = vmatpush.msra.mxu0 0.0
    %1491 = vmatpush.msra.mxu0 0.0
    %1492 = vmatpush.msra.mxu0 0.0
    %1493 = vmatpush.msra.mxu0 %v730
    %1494 = vmatmul.f32.gmra.mxu0 %v1473
    %v1495 = vpop.f32.mrf.mxu0
    %v1496 = vadd.f32 0.0, %v1495
    %1497 = vmatmul.f32.gmra.mxu0 %v1476
    %v1498 = vpop.f32.mrf.mxu0
    %v1499 = vadd.f32 0.0, %v1498
    %1500 = vdwg.mxu0
    %1501 = vxpose.xlu0.b32.start [1/16] %v63, 128
    %1502 = vxpose.xlu0.b32.cont [2/16] %v64, 128
    %1503 = vxpose.xlu0.b32.cont [3/16] 0.0, 128
    %1504 = vxpose.xlu0.b32.cont [4/16] 0.0, 128
    %1505 = vxpose.xlu0.b32.cont [5/16] 0.0, 128
    %1506 = vxpose.xlu0.b32.cont [6/16] 0.0, 128
    %1507 = vxpose.xlu0.b32.cont [7/16] 0.0, 128
    %1508 = vxpose.xlu0.b32.cont [8/16] 0.0, 128
    %1509 = vxpose.xlu0.b32.cont [9/16] 0.0, 128
    %1510 = vxpose.xlu0.b32.cont [10/16] 0.0, 128
    %1511 = vxpose.xlu0.b32.cont [11/16] 0.0, 128
    %1512 = vxpose.xlu0.b32.cont [12/16] 0.0, 128
    %1513 = vxpose.xlu0.b32.cont [13/16] 0.0, 128
    %1514 = vxpose.xlu0.b32.cont [14/16] 0.0, 128
    %1515 = vxpose.xlu0.b32.cont [15/16] 0.0, 128
    %1516 = vxpose.xlu0.b32.end [16/16] 0.0, 128
    %v1517 = vpop.trf.xlu0
    %v1518 = vpop.trf.xlu0
    %v1519 = vpop.trf.xlu0
    %v1520 = vpop.trf.xlu0
    %v1521 = vpop.trf.xlu0
    %v1522 = vpop.trf.xlu0
    %v1523 = vpop.trf.xlu0
    %v1524 = vpop.trf.xlu0
    %v1525 = vpop.trf.xlu0
    %v1526 = vpop.trf.xlu0
    %v1527 = vpop.trf.xlu0
    %v1528 = vpop.trf.xlu0
    %v1529 = vpop.trf.xlu0
    %v1530 = vpop.trf.xlu0
    %v1531 = vpop.trf.xlu0
    %v1532 = vpop.trf.xlu0
    %v1534 = vsel %vm91, %v1517, 0
    %v1537 = vsel %vm91, %v1518, 0
    %v1540 = vsel %vm91, %v1519, 0
    %1542 = vmatpush.msra.mxu0 0.0
    %1543 = vmatpush.msra.mxu0 0.0
    %1544 = vmatpush.msra.mxu0 0.0
    %1545 = vmatpush.msra.mxu0 0.0
    %1546 = vmatpush.msra.mxu0 0.0
    %1547 = vmatpush.msra.mxu0 0.0
    %1548 = vmatpush.msra.mxu0 0.0
    %1549 = vmatpush.msra.mxu0 0.0
    %1550 = vmatpush.msra.mxu0 0.0
    %1551 = vmatpush.msra.mxu0 0.0
    %1552 = vmatpush.msra.mxu0 0.0
    %1553 = vmatpush.msra.mxu0 0.0
    %1554 = vmatpush.msra.mxu0 0.0
    %1555 = vmatpush.msra.mxu0 0.0
    %1556 = vmatpush.msra.mxu0 %v1046
    %1557 = vmatpush.msra.mxu0 %v1045
    %1558 = vmatmul.f32.gmra.mxu0 %v1534
    %v1559 = vpop.f32.mrf.mxu0
    %v1560 = vadd.f32 0.0, %v1559
    %1561 = vmatmul.f32.gmra.mxu0 %v1537
    %v1562 = vpop.f32.mrf.mxu0
    %v1563 = vadd.f32 0.0, %v1562
    %1564 = vmatmul.f32.gmra.mxu0 %v1540
    %v1565 = vpop.f32.mrf.mxu0
    %v1566 = vadd.f32 0.0, %v1565
    %1567 = vdwg.mxu0
    %1568 = vxpose.xlu0.b32.start [1/16] %v53, 128
    %1569 = vxpose.xlu0.b32.cont [2/16] 0.0, 128
    %1570 = vxpose.xlu0.b32.cont [3/16] 0.0, 128
    %1571 = vxpose.xlu0.b32.cont [4/16] 0.0, 128
    %1572 = vxpose.xlu0.b32.cont [5/16] 0.0, 128
    %1573 = vxpose.xlu0.b32.cont [6/16] 0.0, 128
    %1574 = vxpose.xlu0.b32.cont [7/16] 0.0, 128
    %1575 = vxpose.xlu0.b32.cont [8/16] 0.0, 128
    %1576 = vxpose.xlu0.b32.cont [9/16] 0.0, 128
    %1577 = vxpose.xlu0.b32.cont [10/16] 0.0, 128
    %1578 = vxpose.xlu0.b32.cont [11/16] 0.0, 128
    %1579 = vxpose.xlu0.b32.cont [12/16] 0.0, 128
    %1580 = vxpose.xlu0.b32.cont [13/16] 0.0, 128
    %1581 = vxpose.xlu0.b32.cont [14/16] 0.0, 128
    %1582 = vxpose.xlu0.b32.cont [15/16] 0.0, 128
    %1583 = vxpose.xlu0.b32.end [16/16] 0.0, 128
    %v1584 = vpop.trf.xlu0
    %v1585 = vpop.trf.xlu0
    %v1586 = vpop.trf.xlu0
    %v1587 = vpop.trf.xlu0
    %v1588 = vpop.trf.xlu0
    %v1589 = vpop.trf.xlu0
    %v1590 = vpop.trf.xlu0
    %v1591 = vpop.trf.xlu0
    %v1592 = vpop.trf.xlu0
    %v1593 = vpop.trf.xlu0
    %v1594 = vpop.trf.xlu0
    %v1595 = vpop.trf.xlu0
    %v1596 = vpop.trf.xlu0
    %v1597 = vpop.trf.xlu0
    %v1598 = vpop.trf.xlu0
    %v1599 = vpop.trf.xlu0
    %v1601 = vsel %vm1087, %v1584, 0
    %v1604 = vsel %vm1087, %v1585, 0
    %1606 = vmatpush.msra.mxu0 0.0
    %1607 = vmatpush.msra.mxu0 0.0
    %1608 = vmatpush.msra.mxu0 0.0
    %1609 = vmatpush.msra.mxu0 0.0
    %1610 = vmatpush.msra.mxu0 0.0
    %1611 = vmatpush.msra.mxu0 0.0
    %1612 = vmatpush.msra.mxu0 0.0
    %1613 = vmatpush.msra.mxu0 0.0
    %1614 = vmatpush.msra.mxu0 0.0
    %1615 = vmatpush.msra.mxu0 0.0
    %1616 = vmatpush.msra.mxu0 0.0
    %1617 = vmatpush.msra.mxu0 0.0
    %1618 = vmatpush.msra.mxu0 0.0
    %1619 = vmatpush.msra.mxu0 0.0
    %1620 = vmatpush.msra.mxu0 0.0
    %1621 = vmatpush.msra.mxu0 %v731
    %1622 = vmatmul.f32.gmra.mxu0 %v1601
    %v1623 = vpop.f32.mrf.mxu0
    %v1624 = vadd.f32 0.0, %v1623
    %1625 = vmatmul.f32.gmra.mxu0 %v1604
    %v1626 = vpop.f32.mrf.mxu0
    %v1627 = vadd.f32 0.0, %v1626
    %1628 = vdwg.mxu0
    %1629 = vxpose.xlu0.b32.start [1/16] %v65, 128
    %1630 = vxpose.xlu0.b32.cont [2/16] %v66, 128
    %1631 = vxpose.xlu0.b32.cont [3/16] 0.0, 128
    %1632 = vxpose.xlu0.b32.cont [4/16] 0.0, 128
    %1633 = vxpose.xlu0.b32.cont [5/16] 0.0, 128
    %1634 = vxpose.xlu0.b32.cont [6/16] 0.0, 128
    %1635 = vxpose.xlu0.b32.cont [7/16] 0.0, 128
    %1636 = vxpose.xlu0.b32.cont [8/16] 0.0, 128
    %1637 = vxpose.xlu0.b32.cont [9/16] 0.0, 128
    %1638 = vxpose.xlu0.b32.cont [10/16] 0.0, 128
    %1639 = vxpose.xlu0.b32.cont [11/16] 0.0, 128
    %1640 = vxpose.xlu0.b32.cont [12/16] 0.0, 128
    %1641 = vxpose.xlu0.b32.cont [13/16] 0.0, 128
    %1642 = vxpose.xlu0.b32.cont [14/16] 0.0, 128
    %1643 = vxpose.xlu0.b32.cont [15/16] 0.0, 128
    %1644 = vxpose.xlu0.b32.end [16/16] 0.0, 128
    %v1645 = vpop.trf.xlu0
    %v1646 = vpop.trf.xlu0
    %v1647 = vpop.trf.xlu0
    %v1648 = vpop.trf.xlu0
    %v1649 = vpop.trf.xlu0
    %v1650 = vpop.trf.xlu0
    %v1651 = vpop.trf.xlu0
    %v1652 = vpop.trf.xlu0
    %v1653 = vpop.trf.xlu0
    %v1654 = vpop.trf.xlu0
    %v1655 = vpop.trf.xlu0
    %v1656 = vpop.trf.xlu0
    %v1657 = vpop.trf.xlu0
    %v1658 = vpop.trf.xlu0
    %v1659 = vpop.trf.xlu0
    %v1660 = vpop.trf.xlu0
    %v1662 = vsel %vm91, %v1645, 0
    %v1665 = vsel %vm91, %v1646, 0
    %v1668 = vsel %vm91, %v1647, 0
    %1670 = vmatpush.msra.mxu0 0.0
    %1671 = vmatpush.msra.mxu0 0.0
    %1672 = vmatpush.msra.mxu0 0.0
    %1673 = vmatpush.msra.mxu0 0.0
    %1674 = vmatpush.msra.mxu0 0.0
    %1675 = vmatpush.msra.mxu0 0.0
    %1676 = vmatpush.msra.mxu0 0.0
    %1677 = vmatpush.msra.mxu0 0.0
    %1678 = vmatpush.msra.mxu0 0.0
    %1679 = vmatpush.msra.mxu0 0.0
    %1680 = vmatpush.msra.mxu0 0.0
    %1681 = vmatpush.msra.mxu0 0.0
    %1682 = vmatpush.msra.mxu0 0.0
    %1683 = vmatpush.msra.mxu0 0.0
    %1684 = vmatpush.msra.mxu0 %v1048
    %1685 = vmatpush.msra.mxu0 %v1047
    %1686 = vmatmul.f32.gmra.mxu0 %v1662
    %v1687 = vpop.f32.mrf.mxu0
    %v1688 = vadd.f32 0.0, %v1687
    %1689 = vmatmul.f32.gmra.mxu0 %v1665
    %v1690 = vpop.f32.mrf.mxu0
    %v1691 = vadd.f32 0.0, %v1690
    %1692 = vmatmul.f32.gmra.mxu0 %v1668
    %v1693 = vpop.f32.mrf.mxu0
    %v1694 = vadd.f32 0.0, %v1693
    %1695 = vdwg.mxu0
    %1696 = vxpose.xlu0.b32.start [1/16] %v54, 128
    %1697 = vxpose.xlu0.b32.cont [2/16] 0.0, 128
    %1698 = vxpose.xlu0.b32.cont [3/16] 0.0, 128
    %1699 = vxpose.xlu0.b32.cont [4/16] 0.0, 128
    %1700 = vxpose.xlu0.b32.cont [5/16] 0.0, 128
    %1701 = vxpose.xlu0.b32.cont [6/16] 0.0, 128
    %1702 = vxpose.xlu0.b32.cont [7/16] 0.0, 128
    %1703 = vxpose.xlu0.b32.cont [8/16] 0.0, 128
    %1704 = vxpose.xlu0.b32.cont [9/16] 0.0, 128
    %1705 = vxpose.xlu0.b32.cont [10/16] 0.0, 128
    %1706 = vxpose.xlu0.b32.cont [11/16] 0.0, 128
    %1707 = vxpose.xlu0.b32.cont [12/16] 0.0, 128
    %1708 = vxpose.xlu0.b32.cont [13/16] 0.0, 128
    %1709 = vxpose.xlu0.b32.cont [14/16] 0.0, 128
    %1710 = vxpose.xlu0.b32.cont [15/16] 0.0, 128
    %1711 = vxpose.xlu0.b32.end [16/16] 0.0, 128
    %v1712 = vpop.trf.xlu0
    %v1713 = vpop.trf.xlu0
    %v1714 = vpop.trf.xlu0
    %v1715 = vpop.trf.xlu0
    %v1716 = vpop.trf.xlu0
    %v1717 = vpop.trf.xlu0
    %v1718 = vpop.trf.xlu0
    %v1719 = vpop.trf.xlu0
    %v1720 = vpop.trf.xlu0
    %v1721 = vpop.trf.xlu0
    %v1722 = vpop.trf.xlu0
    %v1723 = vpop.trf.xlu0
    %v1724 = vpop.trf.xlu0
    %v1725 = vpop.trf.xlu0
    %v1726 = vpop.trf.xlu0
    %v1727 = vpop.trf.xlu0
    %v1729 = vsel %vm1087, %v1712, 0
    %v1732 = vsel %vm1087, %v1713, 0
    %1734 = vmatpush.msra.mxu0 0.0
    %1735 = vmatpush.msra.mxu0 0.0
    %1736 = vmatpush.msra.mxu0 0.0
    %1737 = vmatpush.msra.mxu0 0.0
    %1738 = vmatpush.msra.mxu0 0.0
    %1739 = vmatpush.msra.mxu0 0.0
    %1740 = vmatpush.msra.mxu0 0.0
    %1741 = vmatpush.msra.mxu0 0.0
    %1742 = vmatpush.msra.mxu0 0.0
    %1743 = vmatpush.msra.mxu0 0.0
    %1744 = vmatpush.msra.mxu0 0.0
    %1745 = vmatpush.msra.mxu0 0.0
    %1746 = vmatpush.msra.mxu0 0.0
    %1747 = vmatpush.msra.mxu0 0.0
    %1748 = vmatpush.msra.mxu0 0.0
    %1749 = vmatpush.msra.mxu0 %v732
    %1750 = vmatmul.f32.gmra.mxu0 %v1729
    %v1751 = vpop.f32.mrf.mxu0
    %v1752 = vadd.f32 0.0, %v1751
    %1753 = vmatmul.f32.gmra.mxu0 %v1732
    %v1754 = vpop.f32.mrf.mxu0
    %v1755 = vadd.f32 0.0, %v1754
    %1756 = vdwg.mxu0
    %1757 = vxpose.xlu0.b32.start [1/16] %v67, 128
    %1758 = vxpose.xlu0.b32.cont [2/16] %v68, 128
    %1759 = vxpose.xlu0.b32.cont [3/16] 0.0, 128
    %1760 = vxpose.xlu0.b32.cont [4/16] 0.0, 128
    %1761 = vxpose.xlu0.b32.cont [5/16] 0.0, 128
    %1762 = vxpose.xlu0.b32.cont [6/16] 0.0, 128
    %1763 = vxpose.xlu0.b32.cont [7/16] 0.0, 128
    %1764 = vxpose.xlu0.b32.cont [8/16] 0.0, 128
    %1765 = vxpose.xlu0.b32.cont [9/16] 0.0, 128
    %1766 = vxpose.xlu0.b32.cont [10/16] 0.0, 128
    %1767 = vxpose.xlu0.b32.cont [11/16] 0.0, 128
    %1768 = vxpose.xlu0.b32.cont [12/16] 0.0, 128
    %1769 = vxpose.xlu0.b32.cont [13/16] 0.0, 128
    %1770 = vxpose.xlu0.b32.cont [14/16] 0.0, 128
    %1771 = vxpose.xlu0.b32.cont [15/16] 0.0, 128
    %1772 = vxpose.xlu0.b32.end [16/16] 0.0, 128
    %v1773 = vpop.trf.xlu0
    %v1774 = vpop.trf.xlu0
    %v1775 = vpop.trf.xlu0
    %v1776 = vpop.trf.xlu0
    %v1777 = vpop.trf.xlu0
    %v1778 = vpop.trf.xlu0
    %v1779 = vpop.trf.xlu0
    %v1780 = vpop.trf.xlu0
    %v1781 = vpop.trf.xlu0
    %v1782 = vpop.trf.xlu0
    %v1783 = vpop.trf.xlu0
    %v1784 = vpop.trf.xlu0
    %v1785 = vpop.trf.xlu0
    %v1786 = vpop.trf.xlu0
    %v1787 = vpop.trf.xlu0
    %v1788 = vpop.trf.xlu0
    %v1790 = vsel %vm91, %v1773, 0
    %v1793 = vsel %vm91, %v1774, 0
    %v1796 = vsel %vm91, %v1775, 0
    %1798 = vmatpush.msra.mxu0 0.0
    %1799 = vmatpush.msra.mxu0 0.0
    %1800 = vmatpush.msra.mxu0 0.0
    %1801 = vmatpush.msra.mxu0 0.0
    %1802 = vmatpush.msra.mxu0 0.0
    %1803 = vmatpush.msra.mxu0 0.0
    %1804 = vmatpush.msra.mxu0 0.0
    %1805 = vmatpush.msra.mxu0 0.0
    %1806 = vmatpush.msra.mxu0 0.0
    %1807 = vmatpush.msra.mxu0 0.0
    %1808 = vmatpush.msra.mxu0 0.0
    %1809 = vmatpush.msra.mxu0 0.0
    %1810 = vmatpush.msra.mxu0 0.0
    %1811 = vmatpush.msra.mxu0 0.0
    %1812 = vmatpush.msra.mxu0 %v1050
    %1813 = vmatpush.msra.mxu0 %v1049
    %1814 = vmatmul.f32.gmra.mxu0 %v1790
    %v1815 = vpop.f32.mrf.mxu0
    %v1816 = vadd.f32 0.0, %v1815
    %1817 = vmatmul.f32.gmra.mxu0 %v1793
    %v1818 = vpop.f32.mrf.mxu0
    %v1819 = vadd.f32 0.0, %v1818
    %1820 = vmatmul.f32.gmra.mxu0 %v1796
    %v1821 = vpop.f32.mrf.mxu0
    %v1822 = vadd.f32 0.0, %v1821
    %1823 = vdwg.mxu0
    %1824 = vxpose.xlu0.b32.start [1/16] %v55, 128
    %1825 = vxpose.xlu0.b32.cont [2/16] 0.0, 128
    %1826 = vxpose.xlu0.b32.cont [3/16] 0.0, 128
    %1827 = vxpose.xlu0.b32.cont [4/16] 0.0, 128
    %1828 = vxpose.xlu0.b32.cont [5/16] 0.0, 128
    %1829 = vxpose.xlu0.b32.cont [6/16] 0.0, 128
    %1830 = vxpose.xlu0.b32.cont [7/16] 0.0, 128
    %1831 = vxpose.xlu0.b32.cont [8/16] 0.0, 128
    %1832 = vxpose.xlu0.b32.cont [9/16] 0.0, 128
    %1833 = vxpose.xlu0.b32.cont [10/16] 0.0, 128
    %1834 = vxpose.xlu0.b32.cont [11/16] 0.0, 128
    %1835 = vxpose.xlu0.b32.cont [12/16] 0.0, 128
    %1836 = vxpose.xlu0.b32.cont [13/16] 0.0, 128
    %1837 = vxpose.xlu0.b32.cont [14/16] 0.0, 128
    %1838 = vxpose.xlu0.b32.cont [15/16] 0.0, 128
    %1839 = vxpose.xlu0.b32.end [16/16] 0.0, 128
    %v1840 = vpop.trf.xlu0
    %v1841 = vpop.trf.xlu0
    %v1842 = vpop.trf.xlu0
    %v1843 = vpop.trf.xlu0
    %v1844 = vpop.trf.xlu0
    %v1845 = vpop.trf.xlu0
    %v1846 = vpop.trf.xlu0
    %v1847 = vpop.trf.xlu0
    %v1848 = vpop.trf.xlu0
    %v1849 = vpop.trf.xlu0
    %v1850 = vpop.trf.xlu0
    %v1851 = vpop.trf.xlu0
    %v1852 = vpop.trf.xlu0
    %v1853 = vpop.trf.xlu0
    %v1854 = vpop.trf.xlu0
    %v1855 = vpop.trf.xlu0
    %v1857 = vsel %vm1087, %v1840, 0
    %v1860 = vsel %vm1087, %v1841, 0
    %1862 = vmatpush.msra.mxu0 0.0
    %1863 = vmatpush.msra.mxu0 0.0
    %1864 = vmatpush.msra.mxu0 0.0
    %1865 = vmatpush.msra.mxu0 0.0
    %1866 = vmatpush.msra.mxu0 0.0
    %1867 = vmatpush.msra.mxu0 0.0
    %1868 = vmatpush.msra.mxu0 0.0
    %1869 = vmatpush.msra.mxu0 0.0
    %1870 = vmatpush.msra.mxu0 0.0
    %1871 = vmatpush.msra.mxu0 0.0
    %1872 = vmatpush.msra.mxu0 0.0
    %1873 = vmatpush.msra.mxu0 0.0
    %1874 = vmatpush.msra.mxu0 0.0
    %1875 = vmatpush.msra.mxu0 0.0
    %1876 = vmatpush.msra.mxu0 0.0
    %1877 = vmatpush.msra.mxu0 %v733
    %1878 = vmatmul.f32.gmra.mxu0 %v1857
    %v1879 = vpop.f32.mrf.mxu0
    %v1880 = vadd.f32 0.0, %v1879
    %1881 = vmatmul.f32.gmra.mxu0 %v1860
    %v1882 = vpop.f32.mrf.mxu0
    %v1883 = vadd.f32 0.0, %v1882
    %1884 = vdwg.mxu0
    %1885 = vxpose.xlu0.b32.start [1/16] %v69, 128
    %1886 = vxpose.xlu0.b32.cont [2/16] %v70, 128
    %1887 = vxpose.xlu0.b32.cont [3/16] 0.0, 128
    %1888 = vxpose.xlu0.b32.cont [4/16] 0.0, 128
    %1889 = vxpose.xlu0.b32.cont [5/16] 0.0, 128
    %1890 = vxpose.xlu0.b32.cont [6/16] 0.0, 128
    %1891 = vxpose.xlu0.b32.cont [7/16] 0.0, 128
    %1892 = vxpose.xlu0.b32.cont [8/16] 0.0, 128
    %1893 = vxpose.xlu0.b32.cont [9/16] 0.0, 128
    %1894 = vxpose.xlu0.b32.cont [10/16] 0.0, 128
    %1895 = vxpose.xlu0.b32.cont [11/16] 0.0, 128
    %1896 = vxpose.xlu0.b32.cont [12/16] 0.0, 128
    %1897 = vxpose.xlu0.b32.cont [13/16] 0.0, 128
    %1898 = vxpose.xlu0.b32.cont [14/16] 0.0, 128
    %1899 = vxpose.xlu0.b32.cont [15/16] 0.0, 128
    %1900 = vxpose.xlu0.b32.end [16/16] 0.0, 128
    %v1901 = vpop.trf.xlu0
    %v1902 = vpop.trf.xlu0
    %v1903 = vpop.trf.xlu0
    %v1904 = vpop.trf.xlu0
    %v1905 = vpop.trf.xlu0
    %v1906 = vpop.trf.xlu0
    %v1907 = vpop.trf.xlu0
    %v1908 = vpop.trf.xlu0
    %v1909 = vpop.trf.xlu0
    %v1910 = vpop.trf.xlu0
    %v1911 = vpop.trf.xlu0
    %v1912 = vpop.trf.xlu0
    %v1913 = vpop.trf.xlu0
    %v1914 = vpop.trf.xlu0
    %v1915 = vpop.trf.xlu0
    %v1916 = vpop.trf.xlu0
    %v1918 = vsel %vm91, %v1901, 0
    %v1921 = vsel %vm91, %v1902, 0
    %v1924 = vsel %vm91, %v1903, 0
    %1926 = vmatpush.msra.mxu0 0.0
    %1927 = vmatpush.msra.mxu0 0.0
    %1928 = vmatpush.msra.mxu0 0.0
    %1929 = vmatpush.msra.mxu0 0.0
    %1930 = vmatpush.msra.mxu0 0.0
    %1931 = vmatpush.msra.mxu0 0.0
    %1932 = vmatpush.msra.mxu0 0.0
    %1933 = vmatpush.msra.mxu0 0.0
    %1934 = vmatpush.msra.mxu0 0.0
    %1935 = vmatpush.msra.mxu0 0.0
    %1936 = vmatpush.msra.mxu0 0.0
    %1937 = vmatpush.msra.mxu0 0.0
    %1938 = vmatpush.msra.mxu0 0.0
    %1939 = vmatpush.msra.mxu0 0.0
    %1940 = vmatpush.msra.mxu0 %v1052
    %1941 = vmatpush.msra.mxu0 %v1051
    %1942 = vmatmul.f32.gmra.mxu0 %v1918
    %v1943 = vpop.f32.mrf.mxu0
    %v1944 = vadd.f32 0.0, %v1943
    %1945 = vmatmul.f32.gmra.mxu0 %v1921
    %v1946 = vpop.f32.mrf.mxu0
    %v1947 = vadd.f32 0.0, %v1946
    %1948 = vmatmul.f32.gmra.mxu0 %v1924
    %v1949 = vpop.f32.mrf.mxu0
    %v1950 = vadd.f32 0.0, %v1949
    %1951 = vdwg.mxu0
    %1952 = vxpose.xlu0.b32.start [1/16] %v56, 128
    %1953 = vxpose.xlu0.b32.cont [2/16] 0.0, 128
    %1954 = vxpose.xlu0.b32.cont [3/16] 0.0, 128
    %1955 = vxpose.xlu0.b32.cont [4/16] 0.0, 128
    %1956 = vxpose.xlu0.b32.cont [5/16] 0.0, 128
    %1957 = vxpose.xlu0.b32.cont [6/16] 0.0, 128
    %1958 = vxpose.xlu0.b32.cont [7/16] 0.0, 128
    %1959 = vxpose.xlu0.b32.cont [8/16] 0.0, 128
    %1960 = vxpose.xlu0.b32.cont [9/16] 0.0, 128
    %1961 = vxpose.xlu0.b32.cont [10/16] 0.0, 128
    %1962 = vxpose.xlu0.b32.cont [11/16] 0.0, 128
    %1963 = vxpose.xlu0.b32.cont [12/16] 0.0, 128
    %1964 = vxpose.xlu0.b32.cont [13/16] 0.0, 128
    %1965 = vxpose.xlu0.b32.cont [14/16] 0.0, 128
    %1966 = vxpose.xlu0.b32.cont [15/16] 0.0, 128
    %1967 = vxpose.xlu0.b32.end [16/16] 0.0, 128
    %v1968 = vpop.trf.xlu0
    %v1969 = vpop.trf.xlu0
    %v1970 = vpop.trf.xlu0
    %v1971 = vpop.trf.xlu0
    %v1972 = vpop.trf.xlu0
    %v1973 = vpop.trf.xlu0
    %v1974 = vpop.trf.xlu0
    %v1975 = vpop.trf.xlu0
    %v1976 = vpop.trf.xlu0
    %v1977 = vpop.trf.xlu0
    %v1978 = vpop.trf.xlu0
    %v1979 = vpop.trf.xlu0
    %v1980 = vpop.trf.xlu0
    %v1981 = vpop.trf.xlu0
    %v1982 = vpop.trf.xlu0
    %v1983 = vpop.trf.xlu0
    %v1985 = vsel %vm1087, %v1968, 0
    %v1988 = vsel %vm1087, %v1969, 0
    %1990 = vmatpush.msra.mxu0 0.0
    %1991 = vmatpush.msra.mxu0 0.0
    %1992 = vmatpush.msra.mxu0 0.0
    %1993 = vmatpush.msra.mxu0 0.0
    %1994 = vmatpush.msra.mxu0 0.0
    %1995 = vmatpush.msra.mxu0 0.0
    %1996 = vmatpush.msra.mxu0 0.0
    %1997 = vmatpush.msra.mxu0 0.0
    %1998 = vmatpush.msra.mxu0 0.0
    %1999 = vmatpush.msra.mxu0 0.0
    %2000 = vmatpush.msra.mxu0 0.0
    %2001 = vmatpush.msra.mxu0 0.0
    %2002 = vmatpush.msra.mxu0 0.0
    %2003 = vmatpush.msra.mxu0 0.0
    %2004 = vmatpush.msra.mxu0 0.0
    %2005 = vmatpush.msra.mxu0 %v734
    %2006 = vmatmul.f32.gmra.mxu0 %v1985
    %v2007 = vpop.f32.mrf.mxu0
    %v2008 = vadd.f32 0.0, %v2007
    %2009 = vmatmul.f32.gmra.mxu0 %v1988
    %v2010 = vpop.f32.mrf.mxu0
    %v2011 = vadd.f32 0.0, %v2010
    %2012 = vdwg.mxu0
    %2013 = vxpose.xlu0.b32.start [1/16] %v71, 128
    %2014 = vxpose.xlu0.b32.cont [2/16] %v72, 128
    %2015 = vxpose.xlu0.b32.cont [3/16] 0.0, 128
    %2016 = vxpose.xlu0.b32.cont [4/16] 0.0, 128
    %2017 = vxpose.xlu0.b32.cont [5/16] 0.0, 128
    %2018 = vxpose.xlu0.b32.cont [6/16] 0.0, 128
    %2019 = vxpose.xlu0.b32.cont [7/16] 0.0, 128
    %2020 = vxpose.xlu0.b32.cont [8/16] 0.0, 128
    %2021 = vxpose.xlu0.b32.cont [9/16] 0.0, 128
    %2022 = vxpose.xlu0.b32.cont [10/16] 0.0, 128
    %2023 = vxpose.xlu0.b32.cont [11/16] 0.0, 128
    %2024 = vxpose.xlu0.b32.cont [12/16] 0.0, 128
    %2025 = vxpose.xlu0.b32.cont [13/16] 0.0, 128
    %2026 = vxpose.xlu0.b32.cont [14/16] 0.0, 128
    %2027 = vxpose.xlu0.b32.cont [15/16] 0.0, 128
    %2028 = vxpose.xlu0.b32.end [16/16] 0.0, 128
    %v2029 = vpop.trf.xlu0
    %v2030 = vpop.trf.xlu0
    %v2031 = vpop.trf.xlu0
    %v2032 = vpop.trf.xlu0
    %v2033 = vpop.trf.xlu0
    %v2034 = vpop.trf.xlu0
    %v2035 = vpop.trf.xlu0
    %v2036 = vpop.trf.xlu0
    %v2037 = vpop.trf.xlu0
    %v2038 = vpop.trf.xlu0
    %v2039 = vpop.trf.xlu0
    %v2040 = vpop.trf.xlu0
    %v2041 = vpop.trf.xlu0
    %v2042 = vpop.trf.xlu0
    %v2043 = vpop.trf.xlu0
    %v2044 = vpop.trf.xlu0
    %v2046 = vsel %vm91, %v2029, 0
    %v2049 = vsel %vm91, %v2030, 0
    %v2052 = vsel %vm91, %v2031, 0
    %2054 = vmatpush.msra.mxu0 0.0
    %2055 = vmatpush.msra.mxu0 0.0
    %2056 = vmatpush.msra.mxu0 0.0
    %2057 = vmatpush.msra.mxu0 0.0
    %2058 = vmatpush.msra.mxu0 0.0
    %2059 = vmatpush.msra.mxu0 0.0
    %2060 = vmatpush.msra.mxu0 0.0
    %2061 = vmatpush.msra.mxu0 0.0
    %2062 = vmatpush.msra.mxu0 0.0
    %2063 = vmatpush.msra.mxu0 0.0
    %2064 = vmatpush.msra.mxu0 0.0
    %2065 = vmatpush.msra.mxu0 0.0
    %2066 = vmatpush.msra.mxu0 0.0
    %2067 = vmatpush.msra.mxu0 0.0
    %2068 = vmatpush.msra.mxu0 %v1054
    %2069 = vmatpush.msra.mxu0 %v1053
    %2070 = vmatmul.f32.gmra.mxu0 %v2046
    %v2071 = vpop.f32.mrf.mxu0
    %v2072 = vadd.f32 0.0, %v2071
    %2073 = vmatmul.f32.gmra.mxu0 %v2049
    %v2074 = vpop.f32.mrf.mxu0
    %v2075 = vadd.f32 0.0, %v2074
    %2076 = vmatmul.f32.gmra.mxu0 %v2052
    %v2077 = vpop.f32.mrf.mxu0
    %v2078 = vadd.f32 0.0, %v2077
    %2079 = vdwg.mxu0
    %2085 = vrot.lane.b32.xlu0 %v1240, 32
    %v2086 = vpop.permute.xlu0 %2085
    %2087 = vrot.lane.b32.xlu0 %v1243, 32
    %v2088 = vpop.permute.xlu0 %2087
    %2089 = vrot.lane.b32.xlu0 %v1304, 32
    %v2090 = vpop.permute.xlu0 %2089
    %2091 = vrot.lane.b32.xlu0 %v1307, 32
    %v2092 = vpop.permute.xlu0 %2091
    %2093 = vrot.lane.b32.xlu0 %v1310, 32
    %v2094 = vpop.permute.xlu0 %2093
    %2105 = vrot.lane.b32.xlu0 %v1368, 64
    %v2106 = vpop.permute.xlu0 %2105
    %2107 = vrot.lane.b32.xlu0 %v1371, 64
    %v2108 = vpop.permute.xlu0 %2107
    %2109 = vrot.lane.b32.xlu0 %v1432, 64
    %v2110 = vpop.permute.xlu0 %2109
    %2111 = vrot.lane.b32.xlu0 %v1435, 64
    %v2112 = vpop.permute.xlu0 %2111
    %2113 = vrot.lane.b32.xlu0 %v1438, 64
    %v2114 = vpop.permute.xlu0 %2113
    %2125 = vrot.lane.b32.xlu0 %v1496, 96
    %v2126 = vpop.permute.xlu0 %2125
    %2127 = vrot.lane.b32.xlu0 %v1499, 96
    %v2128 = vpop.permute.xlu0 %2127
    %2129 = vrot.lane.b32.xlu0 %v1560, 96
    %v2130 = vpop.permute.xlu0 %2129
    %2131 = vrot.lane.b32.xlu0 %v1563, 96
    %v2132 = vpop.permute.xlu0 %2131
    %2133 = vrot.lane.b32.xlu0 %v1566, 96
    %v2134 = vpop.permute.xlu0 %2133
    %2145 = vrot.lane.b32.xlu0 %v1752, 32
    %v2146 = vpop.permute.xlu0 %2145
    %2147 = vrot.lane.b32.xlu0 %v1755, 32
    %v2148 = vpop.permute.xlu0 %2147
    %2149 = vrot.lane.b32.xlu0 %v1816, 32
    %v2150 = vpop.permute.xlu0 %2149
    %2151 = vrot.lane.b32.xlu0 %v1819, 32
    %v2152 = vpop.permute.xlu0 %2151
    %2153 = vrot.lane.b32.xlu0 %v1822, 32
    %v2154 = vpop.permute.xlu0 %2153
    %2165 = vrot.lane.b32.xlu0 %v1880, 64
    %v2166 = vpop.permute.xlu0 %2165
    %2167 = vrot.lane.b32.xlu0 %v1883, 64
    %v2168 = vpop.permute.xlu0 %2167
    %2169 = vrot.lane.b32.xlu0 %v1944, 64
    %v2170 = vpop.permute.xlu0 %2169
    %2171 = vrot.lane.b32.xlu0 %v1947, 64
    %v2172 = vpop.permute.xlu0 %2171
    %2173 = vrot.lane.b32.xlu0 %v1950, 64
    %v2174 = vpop.permute.xlu0 %2173
    %2185 = vrot.lane.b32.xlu0 %v2008, 96
    %v2186 = vpop.permute.xlu0 %2185
    %2187 = vrot.lane.b32.xlu0 %v2011, 96
    %v2188 = vpop.permute.xlu0 %2187
    %2189 = vrot.lane.b32.xlu0 %v2072, 96
    %v2190 = vpop.permute.xlu0 %2189
    %2191 = vrot.lane.b32.xlu0 %v2075, 96
    %v2192 = vpop.permute.xlu0 %2191
    %2193 = vrot.lane.b32.xlu0 %v2078, 96
    %v2194 = vpop.permute.xlu0 %2193
    %v2200 = vsel %vm299, %v1112, %v2086
    %v2201 = vsel %vm299, %v1115, %v2088
    %v2202 = vsel %vm299, %v1176, %v2090
    %v2203 = vsel %vm299, %v1179, %v2092
    %v2204 = vsel %vm299, %v1182, %v2094
    %vm2205 = vcmask 523264
    %v2206 = vsel %vm2205, %v2200, %v2106
    %v2207 = vsel %vm2205, %v2201, %v2108
    %v2208 = vsel %vm2205, %v2202, %v2110
    %v2209 = vsel %vm2205, %v2203, %v2112
    %v2210 = vsel %vm2205, %v2204, %v2114
    %vm2211 = vcmask 785408
    %v2212 = vsel %vm2211, %v2206, %v2126
    %v2213 = vsel %vm2211, %v2207, %v2128
    %v2214 = vsel %vm2211, %v2208, %v2130
    %v2215 = vsel %vm2211, %v2209, %v2132
    %v2216 = vsel %vm2211, %v2210, %v2134
    %v2217 = vsel %vm299, %v1624, %v2146
    %v2218 = vsel %vm299, %v1627, %v2148
    %v2219 = vsel %vm299, %v1688, %v2150
    %v2220 = vsel %vm299, %v1691, %v2152
    %v2221 = vsel %vm299, %v1694, %v2154
    %v2222 = vsel %vm2205, %v2217, %v2166
    %v2223 = vsel %vm2205, %v2218, %v2168
    %v2224 = vsel %vm2205, %v2219, %v2170
    %v2225 = vsel %vm2205, %v2220, %v2172
    %v2226 = vsel %vm2205, %v2221, %v2174
    %v2227 = vsel %vm2211, %v2222, %v2186
    %v2228 = vsel %vm2211, %v2223, %v2188
    %v2229 = vsel %vm2211, %v2224, %v2190
    %v2230 = vsel %vm2211, %v2225, %v2192
    %v2231 = vsel %vm2211, %v2226, %v2194
    %vm2232 = vcmask 326656
    %v2234 = vsel %vm2232, %v73, 0
    %v2237 = vsel %vm2232, %v74, 0
    %v2240 = vsel %vm2232, %v75, 0
    %v2243 = vsel %vm2232, %v76, 0
    %v2246 = vsel %vm2232, %v77, 0
    %2248 = vmatpush.msra.mxu0 0.0
    %2249 = vmatpush.msra.mxu0 0.0
    %2250 = vmatpush.msra.mxu0 0.0
    %2251 = vmatpush.msra.mxu0 0.0
    %2252 = vmatpush.msra.mxu0 0.0
    %2253 = vmatpush.msra.mxu0 0.0
    %2254 = vmatpush.msra.mxu0 0.0
    %2255 = vmatpush.msra.mxu0 0.0
    %2256 = vmatpush.msra.mxu0 0.0
    %2257 = vmatpush.msra.mxu0 0.0
    %2258 = vmatpush.msra.mxu0 0.0
    %2259 = vmatpush.msra.mxu0 %v2216
    %2260 = vmatpush.msra.mxu0 %v2215
    %2261 = vmatpush.msra.mxu0 %v2214
    %2262 = vmatpush.msra.mxu0 %v2213
    %2263 = vmatpush.msra.mxu0 %v2212
    %2264 = vmatmul.f32.gmra.mxu0 %v2234
    %v2265 = vpop.f32.mrf.mxu0
    %v2266 = vadd.f32 0.0, %v2265
    %2267 = vmatmul.f32.gmra.mxu0 %v2237
    %v2268 = vpop.f32.mrf.mxu0
    %v2269 = vadd.f32 0.0, %v2268
    %2270 = vmatmul.f32.gmra.mxu0 %v2240
    %v2271 = vpop.f32.mrf.mxu0
    %v2272 = vadd.f32 0.0, %v2271
    %2273 = vmatmul.f32.gmra.mxu0 %v2243
    %v2274 = vpop.f32.mrf.mxu0
    %v2275 = vadd.f32 0.0, %v2274
    %2276 = vmatmul.f32.gmra.mxu0 %v2246
    %v2277 = vpop.f32.mrf.mxu0
    %v2278 = vadd.f32 0.0, %v2277
    %2279 = vdwg.mxu0
    %2280 = vmatpush.msra.mxu0 0.0
    %2281 = vmatpush.msra.mxu0 0.0
    %2282 = vmatpush.msra.mxu0 0.0
    %2283 = vmatpush.msra.mxu0 0.0
    %2284 = vmatpush.msra.mxu0 0.0
    %2285 = vmatpush.msra.mxu0 0.0
    %2286 = vmatpush.msra.mxu0 0.0
    %2287 = vmatpush.msra.mxu0 0.0
    %2288 = vmatpush.msra.mxu0 0.0
    %2289 = vmatpush.msra.mxu0 0.0
    %2290 = vmatpush.msra.mxu0 0.0
    %2291 = vmatpush.msra.mxu0 %v2231
    %2292 = vmatpush.msra.mxu0 %v2230
    %2293 = vmatpush.msra.mxu0 %v2229
    %2294 = vmatpush.msra.mxu0 %v2228
    %2295 = vmatpush.msra.mxu0 %v2227
    %2296 = vmatmul.f32.gmra.mxu0 %v2234
    %v2297 = vpop.f32.mrf.mxu0
    %v2298 = vadd.f32 0.0, %v2297
    %2299 = vmatmul.f32.gmra.mxu0 %v2237
    %v2300 = vpop.f32.mrf.mxu0
    %v2301 = vadd.f32 0.0, %v2300
    %2302 = vmatmul.f32.gmra.mxu0 %v2240
    %v2303 = vpop.f32.mrf.mxu0
    %v2304 = vadd.f32 0.0, %v2303
    %2305 = vmatmul.f32.gmra.mxu0 %v2243
    %v2306 = vpop.f32.mrf.mxu0
    %v2307 = vadd.f32 0.0, %v2306
    %2308 = vmatmul.f32.gmra.mxu0 %v2246
    %v2309 = vpop.f32.mrf.mxu0
    %v2310 = vadd.f32 0.0, %v2309
    %2311 = vdwg.mxu0
    %v2312 = vld [vmem:[#allocation2] sm:$0xff]
    %v2313 = vld [vmem:[#allocation2 + $0x8] sm:$0xff]
    %v2314 = vld [vmem:[#allocation2 + $0x10] sm:$0xff]
    %v2315 = vld [vmem:[#allocation2 + $0x18] sm:$0xff]
    %v2316 = vld [vmem:[#allocation2 + $0x20] sm:$0xff]
    %v2317 = vld [vmem:[#allocation2 + $0x28] sm:$0xff]
    %v2318 = vld [vmem:[#allocation2 + $0x30] sm:$0xff]
    %v2319 = vld [vmem:[#allocation2 + $0x38] sm:$0xff]
    %v2320 = vld [vmem:[#allocation2 + $0x40] sm:$0xff]
    %v2321 = vld [vmem:[#allocation2 + $0x48] sm:$0xff]
    %v2322 = vld [vmem:[#allocation2 + $0x50] sm:$0xff]
    %v2323 = vld [vmem:[#allocation2 + $0x58] sm:$0xff]
    %v2324 = vld [vmem:[#allocation2 + $0x60] sm:$0xff]
    %v2325 = vld [vmem:[#allocation2 + $0x68] sm:$0xff]
    %v2326 = vld [vmem:[#allocation2 + $0x70] sm:$0xff]
    %v2327 = vld [vmem:[#allocation2 + $0x78] sm:$0xff]
    %v2328 = vld [vmem:[#allocation2 + $0x80] sm:$0xff]
    %v2329 = vld [vmem:[#allocation2 + $0x88] sm:$0xff]
    %v2330 = vld [vmem:[#allocation2 + $0x90] sm:$0xff]
    %v2331 = vld [vmem:[#allocation2 + $0x98] sm:$0xff]
    %v2332 = vld [vmem:[#allocation2 + $0xa0] sm:$0xff]
    %v2333 = vld [vmem:[#allocation2 + $0xa8] sm:$0xff]
    %v2334 = vld [vmem:[#allocation2 + $0xb0] sm:$0xff]
    %v2335 = vld [vmem:[#allocation2 + $0xb8] sm:$0xff]
    %v2336 = vld [vmem:[#allocation2 + $0xc0] sm:$0xff]
    %v2337 = vld [vmem:[#allocation2 + $0xc8] sm:$0xff]
    %v2338 = vld [vmem:[#allocation2 + $0xd0] sm:$0xff]
    %v2339 = vld [vmem:[#allocation2 + $0xd8] sm:$0xff]
    %v2340 = vld [vmem:[#allocation2 + $0xe0] sm:$0xff]
    %v2341 = vld [vmem:[#allocation2 + $0xe8] sm:$0xff]
    %v2342 = vld [vmem:[#allocation2 + $0xf0] sm:$0xff]
    %v2343 = vld [vmem:[#allocation2 + $0xf8] sm:$0xff]
    %v2344 = vld [vmem:[#allocation2 + $0x100] sm:$0xff]
    %v2345 = vld [vmem:[#allocation2 + $0x108] sm:$0xff]
    %v2346 = vld [vmem:[#allocation2 + $0x110] sm:$0xff]
    %v2347 = vld [vmem:[#allocation2 + $0x118] sm:$0xff]
    %v2348 = vld [vmem:[#allocation2 + $0x120] sm:$0xff]
    %v2349 = vld [vmem:[#allocation2 + $0x128] sm:$0xff]
    %v2350 = vld [vmem:[#allocation2 + $0x130] sm:$0xff]
    %v2351 = vld [vmem:[#allocation2 + $0x138] sm:$0xff]
    %v2352 = vld [vmem:[#allocation2 + $0x140] sm:$0xff]
    %v2353 = vld [vmem:[#allocation2 + $0x148] sm:$0xff]
    %v2354 = vld [vmem:[#allocation2 + $0x150] sm:$0xff]
    %v2355 = vld [vmem:[#allocation2 + $0x158] sm:$0xff]
    %v2356 = vld [vmem:[#allocation2 + $0x160] sm:$0xff]
    %v2357 = vld [vmem:[#allocation2 + $0x168] sm:$0xff]
    %v2358 = vld [vmem:[#allocation2 + $0x170] sm:$0xff]
    %v2359 = vld [vmem:[#allocation2 + $0x178] sm:$0xff]
    %v2360 = vld [vmem:[#allocation2 + $0x180] sm:$0xff]
    %v2361 = vld [vmem:[#allocation2 + $0x188] sm:$0xff]
    %v2362 = vld [vmem:[#allocation2 + $0x190] sm:$0xff]
    %v2363 = vld [vmem:[#allocation2 + $0x198] sm:$0xff]
    %v2364 = vld [vmem:[#allocation2 + $0x1a0] sm:$0xff]
    %v2365 = vld [vmem:[#allocation2 + $0x1a8] sm:$0xff]
    %v2366 = vld [vmem:[#allocation2 + $0x1b0] sm:$0xff]
    %v2367 = vld [vmem:[#allocation2 + $0x1b8] sm:$0xff]
    %v2368 = vld [vmem:[#allocation2 + $0x1c0] sm:$0xff]
    %v2369 = vld [vmem:[#allocation2 + $0x1c8] sm:$0xff]
    %v2370 = vld [vmem:[#allocation2 + $0x1d0] sm:$0xff]
    %v2371 = vld [vmem:[#allocation2 + $0x1d8] sm:$0xff]
    %v2372 = vld [vmem:[#allocation2 + $0x1e0] sm:$0xff]
    %v2373 = vld [vmem:[#allocation2 + $0x1e8] sm:$0xff]
    %v2374 = vld [vmem:[#allocation2 + $0x1f0] sm:$0xff]
    %v2375 = vld [vmem:[#allocation2 + $0x1f8] sm:$0xff]
    %v2376 = vld [vmem:[%s8] sm:$0x3]
    %v2378 = vperm.slane %v2376, 0
    %v2379 = vperm.slane %v2376, 1
    %2382 = vmatpush.msra.mxu0 %v2342
    %2383 = vmatpush.msra.mxu0 %v2340
    %2384 = vmatpush.msra.mxu0 %v2338
    %2385 = vmatpush.msra.mxu0 %v2336
    %2386 = vmatpush.msra.mxu0 %v2334
    %2387 = vmatpush.msra.mxu0 %v2332
    %2388 = vmatpush.msra.mxu0 %v2330
    %2389 = vmatpush.msra.mxu0 %v2328
    %2390 = vmatpush.msra.mxu0 %v2326
    %2391 = vmatpush.msra.mxu0 %v2324
    %2392 = vmatpush.msra.mxu0 %v2322
    %2393 = vmatpush.msra.mxu0 %v2320
    %2394 = vmatpush.msra.mxu0 %v2318
    %2395 = vmatpush.msra.mxu0 %v2316
    %2396 = vmatpush.msra.mxu0 %v2314
    %2397 = vmatpush.msra.mxu0 %v2312
    %2398 = vmatmul.f32.gmra.mxu0 %v2266
    %v2399 = vpop.f32.mrf.mxu0
    %v2400 = vadd.f32 %v2378, %v2399
    %2401 = vmatmul.f32.gmra.mxu0 %v2269
    %v2402 = vpop.f32.mrf.mxu0
    %v2403 = vadd.f32 %v2378, %v2402
    %2404 = vmatmul.f32.gmra.mxu0 %v2272
    %v2405 = vpop.f32.mrf.mxu0
    %v2406 = vadd.f32 %v2378, %v2405
    %2407 = vmatmul.f32.gmra.mxu0 %v2275
    %v2408 = vpop.f32.mrf.mxu0
    %v2409 = vadd.f32 %v2378, %v2408
    %2410 = vmatmul.f32.gmra.mxu0 %v2278
    %v2411 = vpop.f32.mrf.mxu0
    %v2412 = vadd.f32 %v2378, %v2411
    %2413 = vdwg.mxu0
    %2414 = vmatpush.msra.mxu0 %v2374
    %2415 = vmatpush.msra.mxu0 %v2372
    %2416 = vmatpush.msra.mxu0 %v2370
    %2417 = vmatpush.msra.mxu0 %v2368
    %2418 = vmatpush.msra.mxu0 %v2366
    %2419 = vmatpush.msra.mxu0 %v2364
    %2420 = vmatpush.msra.mxu0 %v2362
    %2421 = vmatpush.msra.mxu0 %v2360
    %2422 = vmatpush.msra.mxu0 %v2358
    %2423 = vmatpush.msra.mxu0 %v2356
    %2424 = vmatpush.msra.mxu0 %v2354
    %2425 = vmatpush.msra.mxu0 %v2352
    %2426 = vmatpush.msra.mxu0 %v2350
    %2427 = vmatpush.msra.mxu0 %v2348
    %2428 = vmatpush.msra.mxu0 %v2346
    %2429 = vmatpush.msra.mxu0 %v2344
    %2430 = vmatmul.f32.gmra.mxu0 %v2298
    %v2431 = vpop.f32.mrf.mxu0
    %v2432 = vadd.f32 %v2400, %v2431
    %2433 = vmatmul.f32.gmra.mxu0 %v2301
    %v2434 = vpop.f32.mrf.mxu0
    %v2435 = vadd.f32 %v2403, %v2434
    %2436 = vmatmul.f32.gmra.mxu0 %v2304
    %v2437 = vpop.f32.mrf.mxu0
    %v2438 = vadd.f32 %v2406, %v2437
    %2439 = vmatmul.f32.gmra.mxu0 %v2307
    %v2440 = vpop.f32.mrf.mxu0
    %v2441 = vadd.f32 %v2409, %v2440
    %2442 = vmatmul.f32.gmra.mxu0 %v2310
    %v2443 = vpop.f32.mrf.mxu0
    %v2444 = vadd.f32 %v2412, %v2443
    %2445 = vdwg.mxu0
    %2446 = vmatpush.msra.mxu0 %v2343
    %2447 = vmatpush.msra.mxu0 %v2341
    %2448 = vmatpush.msra.mxu0 %v2339
    %2449 = vmatpush.msra.mxu0 %v2337
    %2450 = vmatpush.msra.mxu0 %v2335
    %2451 = vmatpush.msra.mxu0 %v2333
    %2452 = vmatpush.msra.mxu0 %v2331
    %2453 = vmatpush.msra.mxu0 %v2329
    %2454 = vmatpush.msra.mxu0 %v2327
    %2455 = vmatpush.msra.mxu0 %v2325
    %2456 = vmatpush.msra.mxu0 %v2323
    %2457 = vmatpush.msra.mxu0 %v2321
    %2458 = vmatpush.msra.mxu0 %v2319
    %2459 = vmatpush.msra.mxu0 %v2317
    %2460 = vmatpush.msra.mxu0 %v2315
    %2461 = vmatpush.msra.mxu0 %v2313
    %2462 = vmatmul.f32.gmra.mxu0 %v2266
    %v2463 = vpop.f32.mrf.mxu0
    %v2464 = vadd.f32 %v2379, %v2463
    %2465 = vmatmul.f32.gmra.mxu0 %v2269
    %v2466 = vpop.f32.mrf.mxu0
    %v2467 = vadd.f32 %v2379, %v2466
    %2468 = vmatmul.f32.gmra.mxu0 %v2272
    %v2469 = vpop.f32.mrf.mxu0
    %v2470 = vadd.f32 %v2379, %v2469
    %2471 = vmatmul.f32.gmra.mxu0 %v2275
    %v2472 = vpop.f32.mrf.mxu0
    %v2473 = vadd.f32 %v2379, %v2472
    %2474 = vmatmul.f32.gmra.mxu0 %v2278
    %v2475 = vpop.f32.mrf.mxu0
    %v2476 = vadd.f32 %v2379, %v2475
    %2477 = vdwg.mxu0
    %2478 = vmatpush.msra.mxu0 %v2375
    %2479 = vmatpush.msra.mxu0 %v2373
    %2480 = vmatpush.msra.mxu0 %v2371
    %2481 = vmatpush.msra.mxu0 %v2369
    %2482 = vmatpush.msra.mxu0 %v2367
    %2483 = vmatpush.msra.mxu0 %v2365
    %2484 = vmatpush.msra.mxu0 %v2363
    %2485 = vmatpush.msra.mxu0 %v2361
    %2486 = vmatpush.msra.mxu0 %v2359
    %2487 = vmatpush.msra.mxu0 %v2357
    %2488 = vmatpush.msra.mxu0 %v2355
    %2489 = vmatpush.msra.mxu0 %v2353
    %2490 = vmatpush.msra.mxu0 %v2351
    %2491 = vmatpush.msra.mxu0 %v2349
    %2492 = vmatpush.msra.mxu0 %v2347
    %2493 = vmatpush.msra.mxu0 %v2345
    %2494 = vmatmul.f32.gmra.mxu0 %v2298
    %v2495 = vpop.f32.mrf.mxu0
    %v2496 = vadd.f32 %v2464, %v2495
    %2497 = vmatmul.f32.gmra.mxu0 %v2301
    %v2498 = vpop.f32.mrf.mxu0
    %v2499 = vadd.f32 %v2467, %v2498
    %2500 = vmatmul.f32.gmra.mxu0 %v2304
    %v2501 = vpop.f32.mrf.mxu0
    %v2502 = vadd.f32 %v2470, %v2501
    %2503 = vmatmul.f32.gmra.mxu0 %v2307
    %v2504 = vpop.f32.mrf.mxu0
    %v2505 = vadd.f32 %v2473, %v2504
    %2506 = vmatmul.f32.gmra.mxu0 %v2310
    %v2507 = vpop.f32.mrf.mxu0
    %v2508 = vadd.f32 %v2476, %v2507
    %2509 = vdwg.mxu0
    %v2510 = vxor.u32 %v2432, 2147483648
    %v2511 = vxor.u32 %v2496, 2147483648
    %v2512 = vxor.u32 %v2435, 2147483648
    %v2513 = vxor.u32 %v2499, 2147483648
    %v2514 = vxor.u32 %v2438, 2147483648
    %v2515 = vxor.u32 %v2502, 2147483648
    %v2516 = vxor.u32 %v2441, 2147483648
    %v2517 = vxor.u32 %v2505, 2147483648
    %v2518 = vxor.u32 %v2444, 2147483648
    %v2519 = vxor.u32 %v2508, 2147483648
    %v2520 = vmul.f32 %v2510, 1.442695
    %v2521 = vpow.pop %v2520
    %v2522 = vmul.f32 %v2511, 1.442695
    %v2523 = vpow.pop %v2522
    %v2524 = vmul.f32 %v2512, 1.442695
    %v2525 = vpow.pop %v2524
    %v2526 = vmul.f32 %v2513, 1.442695
    %v2527 = vpow.pop %v2526
    %v2528 = vmul.f32 %v2514, 1.442695
    %v2529 = vpow.pop %v2528
    %v2530 = vmul.f32 %v2515, 1.442695
    %v2531 = vpow.pop %v2530
    %v2532 = vmul.f32 %v2516, 1.442695
    %v2533 = vpow.pop %v2532
    %v2534 = vmul.f32 %v2517, 1.442695
    %v2535 = vpow.pop %v2534
    %v2536 = vmul.f32 %v2518, 1.442695
    %v2537 = vpow.pop %v2536
    %v2538 = vmul.f32 %v2519, 1.442695
    %v2539 = vpow.pop %v2538
    %v2540 = vadd.f32 %v2521, 1.0
    %v2541 = vadd.f32 %v2523, 1.0
    %v2542 = vadd.f32 %v2525, 1.0
    %v2543 = vadd.f32 %v2527, 1.0
    %v2544 = vadd.f32 %v2529, 1.0
    %v2545 = vadd.f32 %v2531, 1.0
    %v2546 = vadd.f32 %v2533, 1.0
    %v2547 = vadd.f32 %v2535, 1.0
    %v2548 = vadd.f32 %v2537, 1.0
    %v2549 = vadd.f32 %v2539, 1.0
    %v2550 = vrcp.pop %v2540
    %v2551 = vmul.f32 %v2540, %v2550
    %v2552 = vsub.f32 1.0, %v2551
    %v2553 = vmul.f32 %v2550, %v2552
    %v2554 = vadd.f32 %v2550, %v2553
    %vm2555 = vweird.f32 %v2540
    %vm2556 = vweird.f32 %v2550
    %vm2557 = vmor %vm2555, %vm2556
    %v2558 = vsel %vm2557, %v2550, %v2554
    %v2559 = vand.u32 2147483647, %v2540
    %vm2560 = vcmp.eq.f32.partialorder %v2559, 8.507059e+37
    %v2561 = vand.u32 %v2540, 2147483648
    %v2562 = vor.u32 1.1754944e-38, %v2561
    %v2563 = vsel %vm2560, %v2562, %v2558
    %v2564 = vmul.f32 1.0, %v2563
    %v2565 = vrcp.pop %v2541
    %v2566 = vmul.f32 %v2541, %v2565
    %v2567 = vsub.f32 1.0, %v2566
    %v2568 = vmul.f32 %v2565, %v2567
    %v2569 = vadd.f32 %v2565, %v2568
    %vm2570 = vweird.f32 %v2541
    %vm2571 = vweird.f32 %v2565
    %vm2572 = vmor %vm2570, %vm2571
    %v2573 = vsel %vm2572, %v2565, %v2569
    %v2574 = vand.u32 2147483647, %v2541
    %vm2575 = vcmp.eq.f32.partialorder %v2574, 8.507059e+37
    %v2576 = vand.u32 %v2541, 2147483648
    %v2577 = vor.u32 1.1754944e-38, %v2576
    %v2578 = vsel %vm2575, %v2577, %v2573
    %v2579 = vmul.f32 1.0, %v2578
    %v2580 = vrcp.pop %v2542
    %v2581 = vmul.f32 %v2542, %v2580
    %v2582 = vsub.f32 1.0, %v2581
    %v2583 = vmul.f32 %v2580, %v2582
    %v2584 = vadd.f32 %v2580, %v2583
    %vm2585 = vweird.f32 %v2542
    %vm2586 = vweird.f32 %v2580
    %vm2587 = vmor %vm2585, %vm2586
    %v2588 = vsel %vm2587, %v2580, %v2584
    %v2589 = vand.u32 2147483647, %v2542
    %vm2590 = vcmp.eq.f32.partialorder %v2589, 8.507059e+37
    %v2591 = vand.u32 %v2542, 2147483648
    %v2592 = vor.u32 1.1754944e-38, %v2591
    %v2593 = vsel %vm2590, %v2592, %v2588
    %v2594 = vmul.f32 1.0, %v2593
    %v2595 = vrcp.pop %v2543
    %v2596 = vmul.f32 %v2543, %v2595
    %v2597 = vsub.f32 1.0, %v2596
    %v2598 = vmul.f32 %v2595, %v2597
    %v2599 = vadd.f32 %v2595, %v2598
    %vm2600 = vweird.f32 %v2543
    %vm2601 = vweird.f32 %v2595
    %vm2602 = vmor %vm2600, %vm2601
    %v2603 = vsel %vm2602, %v2595, %v2599
    %v2604 = vand.u32 2147483647, %v2543
    %vm2605 = vcmp.eq.f32.partialorder %v2604, 8.507059e+37
    %v2606 = vand.u32 %v2543, 2147483648
    %v2607 = vor.u32 1.1754944e-38, %v2606
    %v2608 = vsel %vm2605, %v2607, %v2603
    %v2609 = vmul.f32 1.0, %v2608
    %v2610 = vrcp.pop %v2544
    %v2611 = vmul.f32 %v2544, %v2610
    %v2612 = vsub.f32 1.0, %v2611
    %v2613 = vmul.f32 %v2610, %v2612
    %v2614 = vadd.f32 %v2610, %v2613
    %vm2615 = vweird.f32 %v2544
    %vm2616 = vweird.f32 %v2610
    %vm2617 = vmor %vm2615, %vm2616
    %v2618 = vsel %vm2617, %v2610, %v2614
    %v2619 = vand.u32 2147483647, %v2544
    %vm2620 = vcmp.eq.f32.partialorder %v2619, 8.507059e+37
    %v2621 = vand.u32 %v2544, 2147483648
    %v2622 = vor.u32 1.1754944e-38, %v2621
    %v2623 = vsel %vm2620, %v2622, %v2618
    %v2624 = vmul.f32 1.0, %v2623
    %v2625 = vrcp.pop %v2545
    %v2626 = vmul.f32 %v2545, %v2625
    %v2627 = vsub.f32 1.0, %v2626
    %v2628 = vmul.f32 %v2625, %v2627
    %v2629 = vadd.f32 %v2625, %v2628
    %vm2630 = vweird.f32 %v2545
    %vm2631 = vweird.f32 %v2625
    %vm2632 = vmor %vm2630, %vm2631
    %v2633 = vsel %vm2632, %v2625, %v2629
    %v2634 = vand.u32 2147483647, %v2545
    %vm2635 = vcmp.eq.f32.partialorder %v2634, 8.507059e+37
    %v2636 = vand.u32 %v2545, 2147483648
    %v2637 = vor.u32 1.1754944e-38, %v2636
    %v2638 = vsel %vm2635, %v2637, %v2633
    %v2639 = vmul.f32 1.0, %v2638
    %v2640 = vrcp.pop %v2546
    %v2641 = vmul.f32 %v2546, %v2640
    %v2642 = vsub.f32 1.0, %v2641
    %v2643 = vmul.f32 %v2640, %v2642
    %v2644 = vadd.f32 %v2640, %v2643
    %vm2645 = vweird.f32 %v2546
    %vm2646 = vweird.f32 %v2640
    %vm2647 = vmor %vm2645, %vm2646
    %v2648 = vsel %vm2647, %v2640, %v2644
    %v2649 = vand.u32 2147483647, %v2546
    %vm2650 = vcmp.eq.f32.partialorder %v2649, 8.507059e+37
    %v2651 = vand.u32 %v2546, 2147483648
    %v2652 = vor.u32 1.1754944e-38, %v2651
    %v2653 = vsel %vm2650, %v2652, %v2648
    %v2654 = vmul.f32 1.0, %v2653
    %v2655 = vrcp.pop %v2547
    %v2656 = vmul.f32 %v2547, %v2655
    %v2657 = vsub.f32 1.0, %v2656
    %v2658 = vmul.f32 %v2655, %v2657
    %v2659 = vadd.f32 %v2655, %v2658
    %vm2660 = vweird.f32 %v2547
    %vm2661 = vweird.f32 %v2655
    %vm2662 = vmor %vm2660, %vm2661
    %v2663 = vsel %vm2662, %v2655, %v2659
    %v2664 = vand.u32 2147483647, %v2547
    %vm2665 = vcmp.eq.f32.partialorder %v2664, 8.507059e+37
    %v2666 = vand.u32 %v2547, 2147483648
    %v2667 = vor.u32 1.1754944e-38, %v2666
    %v2668 = vsel %vm2665, %v2667, %v2663
    %v2669 = vmul.f32 1.0, %v2668
    %v2670 = vrcp.pop %v2548
    %v2671 = vmul.f32 %v2548, %v2670
    %v2672 = vsub.f32 1.0, %v2671
    %v2673 = vmul.f32 %v2670, %v2672
    %v2674 = vadd.f32 %v2670, %v2673
    %vm2675 = vweird.f32 %v2548
    %vm2676 = vweird.f32 %v2670
    %vm2677 = vmor %vm2675, %vm2676
    %v2678 = vsel %vm2677, %v2670, %v2674
    %v2679 = vand.u32 2147483647, %v2548
    %vm2680 = vcmp.eq.f32.partialorder %v2679, 8.507059e+37
    %v2681 = vand.u32 %v2548, 2147483648
    %v2682 = vor.u32 1.1754944e-38, %v2681
    %v2683 = vsel %vm2680, %v2682, %v2678
    %v2684 = vmul.f32 1.0, %v2683
    %v2685 = vrcp.pop %v2549
    %v2686 = vmul.f32 %v2549, %v2685
    %v2687 = vsub.f32 1.0, %v2686
    %v2688 = vmul.f32 %v2685, %v2687
    %v2689 = vadd.f32 %v2685, %v2688
    %vm2690 = vweird.f32 %v2549
    %vm2691 = vweird.f32 %v2685
    %vm2692 = vmor %vm2690, %vm2691
    %v2693 = vsel %vm2692, %v2685, %v2689
    %v2694 = vand.u32 2147483647, %v2549
    %vm2695 = vcmp.eq.f32.partialorder %v2694, 8.507059e+37
    %v2696 = vand.u32 %v2549, 2147483648
    %v2697 = vor.u32 1.1754944e-38, %v2696
    %v2698 = vsel %vm2695, %v2697, %v2693
    %v2699 = vmul.f32 1.0, %v2698
    %v2700 = vmul.f32 %v2432, %v2564
    %v2701 = vmul.f32 %v2496, %v2579
    %v2702 = vmul.f32 %v2435, %v2594
    %v2703 = vmul.f32 %v2499, %v2609
    %v2704 = vmul.f32 %v2438, %v2624
    %v2705 = vmul.f32 %v2502, %v2639
    %v2706 = vmul.f32 %v2441, %v2654
    %v2707 = vmul.f32 %v2505, %v2669
    %v2708 = vmul.f32 %v2444, %v2684
    %v2709 = vmul.f32 %v2508, %v2699
    %2710 = vst [vmem:[#allocation5] sm:$0xff] %v2700
    %2711 = vst [vmem:[#allocation5 + $0x8] sm:$0xff] %v2701
    %2712 = vst [vmem:[#allocation5 + $0x10] sm:$0xff] %v2702
    %2713 = vst [vmem:[#allocation5 + $0x18] sm:$0xff] %v2703
    %2714 = vst [vmem:[#allocation5 + $0x20] sm:$0xff] %v2704
    %2715 = vst [vmem:[#allocation5 + $0x28] sm:$0xff] %v2705
    %2716 = vst [vmem:[#allocation5 + $0x30] sm:$0xff] %v2706
    %2717 = vst [vmem:[#allocation5 + $0x38] sm:$0xff] %v2707
    %2718 = vst [vmem:[#allocation5 + $0x40] sm:$0xff] %v2708
    %2719 = vst [vmem:[#allocation5 + $0x48] sm:$0xff] %v2709
    // Predicated region
    $region42: #{tpu_custom_call.1} parent=1 // pred_check
      _
    $region43: #{tpu_custom_call.1} parent=1 // pred_check_branch
      %2721 = sbr.rel (0) target = $region45
    $region44: #{tpu_custom_call.1} parent=1 // pred_region
      %2723 = vsyncadd [#allocation4], 0
      %s2724 = sshll.u32 [#allocation5], 4
      %s2725 = int_to_ptr.vmem [resolvable:$true] %s2724
      %s2726 = sshll.u32 %s9, 4
      %s2727 = int_to_ptr.hbm [resolvable:$true] %s2726
      %2732 = dma.vmem_to_hbm [thread:$0]  %s2725, 1280, %s2727, [#allocation4], 256, 256, 16
    $region45: #{tpu_custom_call.1} parent=1 // pred_fallthru
      _
    // Predicated region
    $region46: #{tpu_custom_call.1} parent=1 // pred_check
      _
    $region47: #{tpu_custom_call.1} parent=1 // pred_check_branch
      %2734 = sbr.rel (0) target = $region49
    $region48: #{tpu_custom_call.1} parent=1 // pred_region
      %2736 = dma.done [#allocation4], 1280
    $region49: #{tpu_custom_call.1} parent=1 // pred_fallthru
      _
    %2737 = vsyncpa [#allocation3], 1
    %2738 = vsyncpa [#allocation4], 1

</llo_original>
